<compile_context>
chip_gen: v7x
topology: tpu7x:2x2x1
jax: 0.10.0
libtpu: 0.0.40
codegen_flags: <defaults>
</compile_context>

<pallas_src>
import jax
import jax.numpy as jnp
from jax.experimental import pallas as pl
from jax.experimental.pallas import tpu as pltpu

LN_EPS = 1e-5


def _disc_kernel(
    visual_ref,    # (B, V)      f32
    language_ref,  # (B, L)      f32
    wp_ref,        # (V, L)      bf16  proj weight (transposed)
    bp_ref,        # (1, L)      f32
    w0_hbm_ref,    # (3L, 1024)  bf16  raw HBM ref (memory_space=pl.ANY)
    b0_ref,        # (1, 1024)   f32
    w1_hbm_ref,    # (1024, 512) bf16  raw HBM ref (memory_space=pl.ANY)
    b1_ref,        # (1, 512)    f32
    w2_ref,        # (1, 512)    f32   row of l2 weight
    b2_ref,        # (1, 1)      f32
    out_ref,       # (B, 1)      f32
    w0_vmem,       # scratch (3L, 1024) bf16
    w1_vmem,       # scratch (1024, 512) bf16
    w0_sem,        # DMA semaphore
    w1_sem,        # DMA semaphore
):
    # Kick off both dominant weight transfers immediately; they overlap with
    # the proj / LayerNorm (and, for w1, also the l0 matmul) below.  w0 is
    # issued first because it is consumed first.
    w0_copy = pltpu.make_async_copy(w0_hbm_ref, w0_vmem, w0_sem)
    w0_copy.start()
    w1_copy = pltpu.make_async_copy(w1_hbm_ref, w1_vmem, w1_sem)
    w1_copy.start()

    visual = visual_ref[...]
    language = language_ref[...]

    # vis_proj = visual @ Wp + bp    (bf16 x bf16 -> f32 on the MXU)
    vis_proj = jnp.dot(visual.astype(jnp.bfloat16), wp_ref[...],
                       preferred_element_type=jnp.float32)
    vis_proj = vis_proj + bp_ref[...]

    # LayerNorm over last dim, no affine params. Single-pass variance.
    mean = jnp.mean(vis_proj, axis=-1, keepdims=True)
    mean_sq = jnp.mean(vis_proj * vis_proj, axis=-1, keepdims=True)
    var = jnp.maximum(mean_sq - mean * mean, 0.0)
    vis_proj = (vis_proj - mean) * jax.lax.rsqrt(var + LN_EPS)

    diff = jnp.abs(language - vis_proj)

    # l0 on the concatenated operand: one K = 3L matmul.
    x_cat = jnp.concatenate([language, vis_proj, diff], axis=-1)
    w0_copy.wait()
    h0 = jnp.dot(x_cat.astype(jnp.bfloat16), w0_vmem[...],
                 preferred_element_type=jnp.float32)
    h0 = jnp.maximum(h0 + b0_ref[...], 0.0)

    # l1 + ReLU (wait for the manually prefetched w1 first).
    w1_copy.wait()
    h1 = jnp.dot(h0.astype(jnp.bfloat16), w1_vmem[...],
                 preferred_element_type=jnp.float32)
    h1 = jnp.maximum(h1 + b1_ref[...], 0.0)

    # l2: N=1, so a VPU multiply + lane reduce beats an MXU weight push.
    out = jnp.sum(h1 * w2_ref[...], axis=-1, keepdims=True)
    out_ref[...] = (out + b2_ref[...]).astype(out_ref.dtype)


def global_discriminator_fc_residual(visual, language, params):
    """visual: (B, V) f32, language: (B, L) f32 -> (B, 1) f32."""
    B, _ = visual.shape

    wp = params["proj_w"].T.astype(jnp.bfloat16)   # (V, L)
    bp = params["proj_b"][None, :]                 # (1, L)
    w0 = params["l0_w"].T.astype(jnp.bfloat16)     # (3L, 1024)
    b0 = params["l0_b"][None, :]                   # (1, 1024)
    w1 = params["l1_w"].T.astype(jnp.bfloat16)     # (1024, 512)
    b1 = params["l1_b"][None, :]                   # (1, 512)
    w2 = params["l2_w"]                            # (1, 512) f32 row
    b2 = params["l2_b"][None, :]                   # (1, 1)

    def full(a):
        return pl.BlockSpec(a.shape, lambda: (0,) * a.ndim)

    in_specs = [
        full(visual), full(language), full(wp), full(bp),
        pl.BlockSpec(memory_space=pl.ANY),   # w0 stays in HBM; DMA'd in-kernel
        full(b0),
        pl.BlockSpec(memory_space=pl.ANY),   # w1 stays in HBM; DMA'd in-kernel
        full(b1), full(w2), full(b2),
    ]

    return pl.pallas_call(
        _disc_kernel,
        out_shape=jax.ShapeDtypeStruct((B, 1), jnp.float32),
        grid=(),
        in_specs=in_specs,
        out_specs=pl.BlockSpec((B, 1), lambda: (0, 0)),
        scratch_shapes=[
            pltpu.VMEM(w0.shape, jnp.bfloat16),
            pltpu.VMEM(w1.shape, jnp.bfloat16),
            pltpu.SemaphoreType.DMA(()),
            pltpu.SemaphoreType.DMA(()),
        ],
        compiler_params=pltpu.CompilerParams(vmem_limit_bytes=16 << 20),
    )(visual, language, wp, bp, w0, b0, w1, b1, w2, b2)


def _init_params(key, visual_size, language_size):
    """Deterministic init mimicking nn.Linear default (uniform +-1/sqrt(fan_in))."""
    def linear(key, out_f, in_f):
        kw, kb = jax.random.split(key)
        bound = 1.0 / jnp.sqrt(in_f)
        w = jax.random.uniform(kw, (out_f, in_f), jnp.float32, -bound, bound)
        b = jax.random.uniform(kb, (out_f,), jnp.float32, -bound, bound)
        return w, b

    k0, k1, k2, k3 = jax.random.split(key, 4)
    proj_w, proj_b = linear(k0, language_size, visual_size)
    l0_w, l0_b = linear(k1, 1024, 3 * language_size)
    l1_w, l1_b = linear(k2, 512, 1024)
    l2_w, l2_b = linear(k3, 1, 512)
    return dict(proj_w=proj_w, proj_b=proj_b, l0_w=l0_w, l0_b=l0_b,
                l1_w=l1_w, l1_b=l1_b, l2_w=l2_w, l2_b=l2_b)


def _reference(visual, language, p):
    """Pure-f32 reference of the PyTorch forward pass."""
    vis_proj = visual @ p["proj_w"].T + p["proj_b"]
    mean = vis_proj.mean(-1, keepdims=True)
    var = ((vis_proj - mean) ** 2).mean(-1, keepdims=True)
    vis_proj = (vis_proj - mean) / jnp.sqrt(var + LN_EPS)
    x = jnp.concatenate([language, vis_proj, jnp.abs(language - vis_proj)], -1)
    out = jax.nn.relu(x @ p["l0_w"].T + p["l0_b"])
    out = jax.nn.relu(out @ p["l1_w"].T + p["l1_b"])
    return out @ p["l2_w"].T + p["l2_b"]


if __name__ == "__main__":
    B, VISUAL, LANGUAGE = 8, 32, 64
    key = jax.random.PRNGKey(0)
    kv, kl, kp = jax.random.split(key, 3)

    visual = jax.random.normal(kv, (B, VISUAL), jnp.float32)
    language = jax.random.normal(kl, (B, LANGUAGE), jnp.float32)
    params = _init_params(kp, VISUAL, LANGUAGE)

    out = jax.block_until_ready(
        global_discriminator_fc_residual(visual, language, params))

    ref = _reference(visual, language, params)
    assert out.shape == (B, 1), out.shape
    # Tolerance covers bf16 weight quantization (f32 accumulation on all dots).
    assert jnp.allclose(out, ref, atol=2e-2, rtol=2e-2), (out, ref)
    print("KERNEL_OK")
</pallas_src>

<mosaic_0001>
module attributes {stable_mosaic.version = 11 : i64} {
  func.func @_disc_kernel(%arg0: memref<8x32xf32, #tpu.memory_space<vmem>>, %arg1: memref<8x64xf32, #tpu.memory_space<vmem>>, %arg2: memref<32x64xbf16, #tpu.memory_space<vmem>>, %arg3: memref<1x64xf32, #tpu.memory_space<vmem>>, %arg4: memref<192x1024xbf16, #tpu.memory_space<any>>, %arg5: memref<1x1024xf32, #tpu.memory_space<vmem>>, %arg6: memref<1024x512xbf16, #tpu.memory_space<any>>, %arg7: memref<1x512xf32, #tpu.memory_space<vmem>>, %arg8: memref<1x512xf32, #tpu.memory_space<vmem>>, %arg9: memref<1x1xf32, #tpu.memory_space<vmem>>, %arg10: memref<8x1xf32, #tpu.memory_space<vmem>>, %arg11: memref<192x1024xbf16, #tpu.memory_space<vmem>>, %arg12: memref<1024x512xbf16, #tpu.memory_space<vmem>>, %arg13: memref<!tpu.dma_semaphore, #tpu.memory_space<semaphore_mem>>, %arg14: memref<!tpu.dma_semaphore, #tpu.memory_space<semaphore_mem>>) attributes {dimension_semantics = [], scalar_prefetch = 0 : i64, scratch_operands = 4 : i64, tpu.core_type = #tpu.core_type<tc>} {
    tpu.enqueue_dma source(%arg4 : memref<192x1024xbf16, #tpu.memory_space<any>>) target(%arg11 : memref<192x1024xbf16, #tpu.memory_space<vmem>>) target_semaphore(%arg13 : memref<!tpu.dma_semaphore, #tpu.memory_space<semaphore_mem>>)
    tpu.enqueue_dma source(%arg6 : memref<1024x512xbf16, #tpu.memory_space<any>>) target(%arg12 : memref<1024x512xbf16, #tpu.memory_space<vmem>>) target_semaphore(%arg14 : memref<!tpu.dma_semaphore, #tpu.memory_space<semaphore_mem>>)
    %c0 = arith.constant 0 : index
    %c0_0 = arith.constant 0 : index
    %0 = vector.load %arg0[%c0, %c0_0] : memref<8x32xf32, #tpu.memory_space<vmem>>, vector<8x32xf32>
    %c0_1 = arith.constant 0 : index
    %c0_2 = arith.constant 0 : index
    %1 = vector.load %arg1[%c0_1, %c0_2] : memref<8x64xf32, #tpu.memory_space<vmem>>, vector<8x64xf32>
    %2 = arith.truncf %0 : vector<8x32xf32> to vector<8x32xbf16>
    %c0_3 = arith.constant 0 : index
    %c0_4 = arith.constant 0 : index
    %3 = vector.load %arg2[%c0_3, %c0_4] : memref<32x64xbf16, #tpu.memory_space<vmem>>, vector<32x64xbf16>
    %cst = arith.constant dense<0.000000e+00> : vector<8x64xf32>
    %4 = tpu.matmul %2, %3, %cst {dimension_numbers = #tpu.dot_dimension_numbers<[1], [0], [0], [1], [0, 0, 1, 1], [], []>} : vector<8x32xbf16>, vector<32x64xbf16>, vector<8x64xf32> -> vector<8x64xf32>
    %c0_5 = arith.constant 0 : index
    %c0_6 = arith.constant 0 : index
    %5 = vector.load %arg3[%c0_5, %c0_6] : memref<1x64xf32, #tpu.memory_space<vmem>>, vector<1x64xf32>
    %6 = vector.broadcast %5 : vector<1x64xf32> to vector<8x64xf32>
    %7 = arith.addf %4, %6 : vector<8x64xf32>
    %cst_7 = arith.constant dense<0.000000e+00> : vector<8xf32>
    %8 = vector.multi_reduction <add>, %7, %cst_7 [1] : vector<8x64xf32> to vector<8xf32>
    %9 = vector.shape_cast %8 : vector<8xf32> to vector<8x1xf32>
    %cst_8 = arith.constant 6.400000e+01 : f32
    %10 = vector.broadcast %cst_8 : f32 to vector<8x1xf32>
    %11 = arith.divf %9, %10 : vector<8x1xf32>
    %12 = arith.mulf %7, %7 : vector<8x64xf32>
    %cst_9 = arith.constant dense<0.000000e+00> : vector<8xf32>
    %13 = vector.multi_reduction <add>, %12, %cst_9 [1] : vector<8x64xf32> to vector<8xf32>
    %14 = vector.shape_cast %13 : vector<8xf32> to vector<8x1xf32>
    %cst_10 = arith.constant 6.400000e+01 : f32
    %15 = vector.broadcast %cst_10 : f32 to vector<8x1xf32>
    %16 = arith.divf %14, %15 : vector<8x1xf32>
    %17 = arith.mulf %11, %11 : vector<8x1xf32>
    %18 = arith.subf %16, %17 : vector<8x1xf32>
    %cst_11 = arith.constant 0.000000e+00 : f32
    %19 = vector.broadcast %cst_11 : f32 to vector<8x1xf32>
    %20 = arith.maximumf %18, %19 : vector<8x1xf32>
    %21 = vector.broadcast %11 : vector<8x1xf32> to vector<8x64xf32>
    %22 = arith.subf %7, %21 : vector<8x64xf32>
    %cst_12 = arith.constant 9.99999974E-6 : f32
    %23 = vector.broadcast %cst_12 : f32 to vector<8x1xf32>
    %24 = arith.addf %20, %23 : vector<8x1xf32>
    %25 = math.rsqrt %24 : vector<8x1xf32>
    %26 = vector.broadcast %25 : vector<8x1xf32> to vector<8x64xf32>
    %27 = arith.mulf %22, %26 : vector<8x64xf32>
    %28 = arith.subf %1, %27 : vector<8x64xf32>
    %29 = math.absf %28 : vector<8x64xf32>
    %30 = tpu.concatenate %1, %27, %29 in 1 : vector<8x64xf32>, vector<8x64xf32>, vector<8x64xf32> -> vector<8x192xf32>
    tpu.wait_dma2 semaphore(%arg13 : memref<!tpu.dma_semaphore, #tpu.memory_space<semaphore_mem>>) src(%arg4 : memref<192x1024xbf16, #tpu.memory_space<any>>) dst(%arg11 : memref<192x1024xbf16, #tpu.memory_space<vmem>>)
    %31 = arith.truncf %30 : vector<8x192xf32> to vector<8x192xbf16>
    %c0_13 = arith.constant 0 : index
    %c0_14 = arith.constant 0 : index
    %32 = vector.load %arg11[%c0_13, %c0_14] : memref<192x1024xbf16, #tpu.memory_space<vmem>>, vector<192x1024xbf16>
    %cst_15 = arith.constant dense<0.000000e+00> : vector<8x1024xf32>
    %33 = tpu.matmul %31, %32, %cst_15 {dimension_numbers = #tpu.dot_dimension_numbers<[1], [0], [0], [1], [0, 0, 1, 1], [], []>} : vector<8x192xbf16>, vector<192x1024xbf16>, vector<8x1024xf32> -> vector<8x1024xf32>
    %c0_16 = arith.constant 0 : index
    %c0_17 = arith.constant 0 : index
    %34 = vector.load %arg5[%c0_16, %c0_17] : memref<1x1024xf32, #tpu.memory_space<vmem>>, vector<1x1024xf32>
    %35 = vector.broadcast %34 : vector<1x1024xf32> to vector<8x1024xf32>
    %36 = arith.addf %33, %35 : vector<8x1024xf32>
    %cst_18 = arith.constant 0.000000e+00 : f32
    %37 = vector.broadcast %cst_18 : f32 to vector<8x1024xf32>
    %38 = arith.maximumf %36, %37 : vector<8x1024xf32>
    tpu.wait_dma2 semaphore(%arg14 : memref<!tpu.dma_semaphore, #tpu.memory_space<semaphore_mem>>) src(%arg6 : memref<1024x512xbf16, #tpu.memory_space<any>>) dst(%arg12 : memref<1024x512xbf16, #tpu.memory_space<vmem>>)
    %39 = arith.truncf %38 : vector<8x1024xf32> to vector<8x1024xbf16>
    %c0_19 = arith.constant 0 : index
    %c0_20 = arith.constant 0 : index
    %40 = vector.load %arg12[%c0_19, %c0_20] : memref<1024x512xbf16, #tpu.memory_space<vmem>>, vector<1024x512xbf16>
    %cst_21 = arith.constant dense<0.000000e+00> : vector<8x512xf32>
    %41 = tpu.matmul %39, %40, %cst_21 {dimension_numbers = #tpu.dot_dimension_numbers<[1], [0], [0], [1], [0, 0, 1, 1], [], []>} : vector<8x1024xbf16>, vector<1024x512xbf16>, vector<8x512xf32> -> vector<8x512xf32>
    %c0_22 = arith.constant 0 : index
    %c0_23 = arith.constant 0 : index
    %42 = vector.load %arg7[%c0_22, %c0_23] : memref<1x512xf32, #tpu.memory_space<vmem>>, vector<1x512xf32>
    %43 = vector.broadcast %42 : vector<1x512xf32> to vector<8x512xf32>
    %44 = arith.addf %41, %43 : vector<8x512xf32>
    %cst_24 = arith.constant 0.000000e+00 : f32
    %45 = vector.broadcast %cst_24 : f32 to vector<8x512xf32>
    %46 = arith.maximumf %44, %45 : vector<8x512xf32>
    %c0_25 = arith.constant 0 : index
    %c0_26 = arith.constant 0 : index
    %47 = vector.load %arg8[%c0_25, %c0_26] : memref<1x512xf32, #tpu.memory_space<vmem>>, vector<1x512xf32>
    %48 = vector.broadcast %47 : vector<1x512xf32> to vector<8x512xf32>
    %49 = arith.mulf %46, %48 : vector<8x512xf32>
    %cst_27 = arith.constant dense<0.000000e+00> : vector<8xf32>
    %50 = vector.multi_reduction <add>, %49, %cst_27 [1] : vector<8x512xf32> to vector<8xf32>
    %51 = vector.shape_cast %50 : vector<8xf32> to vector<8x1xf32>
    %c0_28 = arith.constant 0 : index
    %c0_29 = arith.constant 0 : index
    %52 = vector.load %arg9[%c0_28, %c0_29] : memref<1x1xf32, #tpu.memory_space<vmem>>, vector<1x1xf32>
    %53 = vector.broadcast %52 : vector<1x1xf32> to vector<8x1xf32>
    %54 = arith.addf %51, %53 : vector<8x1xf32>
    %c0_30 = arith.constant 0 : index
    %c0_31 = arith.constant 0 : index
    %55 = vector.load %arg10[%c0_30, %c0_31] : memref<8x1xf32, #tpu.memory_space<vmem>>, vector<8x1xf32>
    tpu.vector_store %arg10[%c0_30, %c0_31], %54 {strides = array<i32>} : memref<8x1xf32, #tpu.memory_space<vmem>>, vector<8x1xf32>,
    return
  }
}

</mosaic_0001>

<llo_original>
// kernel: tpu_custom_call.1
$region0: #{tpu_custom_call.1}
  #allocation0 [shape = 'u32[]', space=smem, size = 0x4, offset = 0x4, fixed_abs, tag = 'smem constant byte address 0x4 - core index']
  #allocation1 [shape = 'u32[144,128]{1,0:T(1,128)}', space=vmem, size = 0x12000, scoped, tag = 'internal scratch']
  #allocation2 [shape = 'bf16[192,1024]{1,0:T(16,128)(2,1)}', space=vmem, size = 0x60000, scoped, tag = 'scratch operand']
  #allocation3 [shape = 'bf16[1024,512]{1,0:T(16,128)(2,1)}', space=vmem, size = 0x100000, scoped, tag = 'scratch operand']
  #allocation4 [shape = 's32[1]{0}', space=sflag, size = 0x4, scoped, tag = 'scratch operand']
  #allocation5 [shape = 's32[1]{0}', space=sflag, size = 0x4, scoped, tag = 'scratch operand']
  #allocation6 [shape = 'f32[1,1]{1,0:T(1,128)S(1)}', space=vmem, size = 0x200, scoped, tag = 'scoped memory for tpu_custom_call.1']
  #allocation12 [shape = 's32[]', space=sflag, size = 0x4, offset = 0, fixed_abs, tag = 'sflag constant byte address 0x0 - dummy sync flag']
  #allocation14 [shape = 's32[]', space=sflag, size = 0x4, offset = 0, fixed_abs, tag = 'sflag constant byte address 0x0 - dummy sync flag']
  %s0 = inlined_call_operand.hbm [shape: f32[8,32], index: 0, kind: input, shape index: {}]
  %s1 = inlined_call_operand.hbm [shape: f32[8,64], index: 1, kind: input, shape index: {}]
  %s2 = inlined_call_operand.hbm [shape: bf16[32,64], index: 2, kind: input, shape index: {}]
  %s3 = inlined_call_operand.vmem [shape: f32[1,64], index: 3, kind: input, shape index: {}]
  %s4 = inlined_call_operand.hbm [shape: bf16[192,1024], index: 4, kind: input, shape index: {}]
  %s5 = inlined_call_operand.vmem [shape: f32[1,1024], index: 5, kind: input, shape index: {}]
  %s6 = inlined_call_operand.hbm [shape: bf16[1024,512], index: 6, kind: input, shape index: {}]
  %s7 = inlined_call_operand.vmem [shape: f32[1,512], index: 7, kind: input, shape index: {}]
  %s8 = inlined_call_operand.vmem [shape: f32[1,512], index: 8, kind: input, shape index: {}]
  %s9 = inlined_call_operand.<no memory space> [shape: f32[1,1], index: 9, kind: input, shape index: {}]
  %s10 = inlined_call_operand.vmem [shape: f32[8,1], index: 10, kind: output, shape index: {}]
  %s11 = sld [smem:[#allocation0]]
  $region54: #{tpu_custom_call.1} parent=0
    _
  %s13 = ssub.s32 1, %s11
  %s14 = scalar_select 0, %s13, %s11
  %v15 = vstv %s9
  %16 = vst [vmem:[#allocation6] sm:$0x1] %v15
  $region1: #{tpu_custom_call.1} parent=0
    #allocation7 [shape = 'u8[4096]{0}', space=vmem, size = 0x1000, scoped, tag = 'input window, operand 0, single buffered']
    #allocation8 [shape = 's32[1]{0}', space=sflag, size = 0x4, scoped, tag = 'scoped memory for tpu_custom_call.1']
    #allocation9 [shape = 'u8[4096]{0}', space=vmem, size = 0x1000, scoped, tag = 'input window, operand 1, single buffered']
    #allocation10 [shape = 's32[1]{0}', space=sflag, size = 0x4, scoped, tag = 'scoped memory for tpu_custom_call.1']
    #allocation11 [shape = 'u8[8192]{0}', space=vmem, size = 0x2000, scoped, tag = 'input window, operand 2, single buffered']
    #allocation13 [shape = 'u32[9]{0}', space=smem, size = 0x24, scoped, tag = 'DMA stride descriptor']
    #allocation15 [shape = 'u32[9]{0}', space=smem, size = 0x24, scoped, tag = 'DMA stride descriptor']
    %17 = vsyncpa [#allocation8], 0
    %18 = vsyncpa [#allocation10], 0
    // Predicated region
    $region2: #{tpu_custom_call.1} parent=1 // pred_check
      _
    $region3: #{tpu_custom_call.1} parent=1 // pred_check_branch
      %20 = sbr.rel (0) target = $region5
    $region4: #{tpu_custom_call.1} parent=1 // pred_region
      %s22 = ssub.s32 128, 128
      %23 = vsyncadd [#allocation8], %s22
      %s25 = sshll.u32 [#allocation7], 4
      %s26 = int_to_ptr.vmem [resolvable:$true] %s25
      %28 = dma.hbm_to_vmem [thread:$0]  %s0, 128, %s26, [#allocation8]
    $region5: #{tpu_custom_call.1} parent=1 // pred_fallthru
      _
    // Predicated region
    $region6: #{tpu_custom_call.1} parent=1 // pred_check
      _
    $region7: #{tpu_custom_call.1} parent=1 // pred_check_branch
      %30 = sbr.rel (0) target = $region9
    $region8: #{tpu_custom_call.1} parent=1 // pred_region
      %s32 = ssub.s32 128, 128
      %33 = vsyncadd [#allocation10], %s32
      %s35 = sshll.u32 [#allocation9], 4
      %s36 = int_to_ptr.vmem [resolvable:$true] %s35
      %38 = dma.hbm_to_vmem [thread:$0]  %s1, 128, %s36, [#allocation10]
    $region9: #{tpu_custom_call.1} parent=1 // pred_fallthru
      _
    // Predicated region
    $region10: #{tpu_custom_call.1} parent=1 // pred_check
      _
    $region11: #{tpu_custom_call.1} parent=1 // pred_check_branch
      %40 = sbr.rel (0) target = $region13
    $region12: #{tpu_custom_call.1} parent=1 // pred_region
      %s42 = ssub.s32 256, 256
      %43 = vsyncadd [#allocation10], %s42
      %s44 = sshll.u32 [#allocation11], 4
      %s45 = int_to_ptr.vmem [resolvable:$true] %s44
      %50 = dma.hbm_to_vmem [thread:$0]  %s2, 256, %s45, [#allocation10], 64, 64, 4
    $region13: #{tpu_custom_call.1} parent=1 // pred_fallthru
      _
    // Predicated region
    $region14: #{tpu_custom_call.1} parent=1 // pred_check
      _
    $region15: #{tpu_custom_call.1} parent=1 // pred_check_branch
      %52 = sbr.rel (0) target = $region17
    $region16: #{tpu_custom_call.1} parent=1 // pred_region
      _
    $region17: #{tpu_custom_call.1} parent=1 // pred_fallthru
      _
    // Predicated region
    $region18: #{tpu_custom_call.1} parent=1 // pred_check
      _
    $region19: #{tpu_custom_call.1} parent=1 // pred_check_branch
      %54 = sbr.rel (0) target = $region21
    $region20: #{tpu_custom_call.1} parent=1 // pred_region
      _
    $region21: #{tpu_custom_call.1} parent=1 // pred_fallthru
      _
    // Predicated region
    $region22: #{tpu_custom_call.1} parent=1 // pred_check
      _
    $region23: #{tpu_custom_call.1} parent=1 // pred_check_branch
      %56 = sbr.rel (0) target = $region25
    $region24: #{tpu_custom_call.1} parent=1 // pred_region
      _
    $region25: #{tpu_custom_call.1} parent=1 // pred_fallthru
      _
    // Predicated region
    $region26: #{tpu_custom_call.1} parent=1 // pred_check
      _
    $region27: #{tpu_custom_call.1} parent=1 // pred_check_branch
      %58 = sbr.rel (0) target = $region29
    $region28: #{tpu_custom_call.1} parent=1 // pred_region
      _
    $region29: #{tpu_custom_call.1} parent=1 // pred_fallthru
      _
    // Predicated region
    $region30: #{tpu_custom_call.1} parent=1 // pred_check
      _
    $region31: #{tpu_custom_call.1} parent=1 // pred_check_branch
      %60 = sbr.rel (0) target = $region33
    $region32: #{tpu_custom_call.1} parent=1 // pred_region
      _
    $region33: #{tpu_custom_call.1} parent=1 // pred_fallthru
      _
    // Predicated region
    $region34: #{tpu_custom_call.1} parent=1 // pred_check
      _
    $region35: #{tpu_custom_call.1} parent=1 // pred_check_branch
      %62 = sbr.rel (0) target = $region37
    $region36: #{tpu_custom_call.1} parent=1 // pred_region
      %63 = dma.done [#allocation8], 128
    $region37: #{tpu_custom_call.1} parent=1 // pred_fallthru
      _
    // Predicated region
    $region38: #{tpu_custom_call.1} parent=1 // pred_check
      _
    $region39: #{tpu_custom_call.1} parent=1 // pred_check_branch
      %65 = sbr.rel (0) target = $region41
    $region40: #{tpu_custom_call.1} parent=1 // pred_region
      %66 = dma.done [#allocation10], 128
    $region41: #{tpu_custom_call.1} parent=1 // pred_fallthru
      _
    // Predicated region
    $region42: #{tpu_custom_call.1} parent=1 // pred_check
      _
    $region43: #{tpu_custom_call.1} parent=1 // pred_check_branch
      %68 = sbr.rel (0) target = $region45
    $region44: #{tpu_custom_call.1} parent=1 // pred_region
      %69 = dma.done [#allocation10], 256
    $region45: #{tpu_custom_call.1} parent=1 // pred_fallthru
      _
    %s72 = sshll.u32 1, 14
    %s73 = sxor.u32 4294967295, %s72
    %s75 = sld [smem:[#allocation0]]
    %s76 = sadd.s32 2, %s75
    %s78 = sshll.u32 7, 26
    %s79 = sxor.u32 4294967295, %s78
    %s80 = sand.u32 0, %s79
    %s81 = sshll.u32 %s76, 26
    %s82 = sor.u32 %s80, %s81
    %s83 = sshll.u32 [#allocation2], 4
    %s84 = int_to_ptr.vmem [resolvable:$true] %s83
    %87 = sst [smem:[#allocation13]] 1024
    %s88 = scalar_lea.smem [#allocation13], 1
    %89 = sst [smem:[%s88]] 1024
    %s90 = scalar_lea.smem [#allocation13], 2
    %91 = sst [smem:[%s90]] 8
    %s92 = scalar_lea.smem [#allocation13], 3
    %93 = sst [smem:[%s92]] 64
    %s94 = scalar_lea.smem [#allocation13], 4
    %95 = sst [smem:[%s94]] 128
    %s96 = scalar_lea.smem [#allocation13], 5
    %97 = sst [smem:[%s96]] 2
    %s98 = scalar_lea.smem [#allocation13], 6
    %99 = sst [smem:[%s98]] 512
    %s100 = scalar_lea.smem [#allocation13], 7
    %101 = sst [smem:[%s100]] 64
    %s102 = scalar_lea.smem [#allocation13], 8
    %103 = sst [smem:[%s102]] 4
    %105 = dma.general %s4, 12288, %s84, [#allocation4], [#allocation12], [#allocation13], %s82, 0
    %s107 = sshll.u32 1, 14
    %s108 = sxor.u32 4294967295, %s107
    %s110 = sadd.s32 2, %s75
    %s112 = sshll.u32 7, 26
    %s113 = sxor.u32 4294967295, %s112
    %s114 = sand.u32 0, %s113
    %s115 = sshll.u32 %s110, 26
    %s116 = sor.u32 %s114, %s115
    %s117 = sshll.u32 [#allocation3], 4
    %s118 = int_to_ptr.vmem [resolvable:$true] %s117
    %121 = sst [smem:[#allocation15]] 512
    %s122 = scalar_lea.smem [#allocation15], 1
    %123 = sst [smem:[%s122]] 512
    %s124 = scalar_lea.smem [#allocation15], 2
    %125 = sst [smem:[%s124]] 4
    %s126 = scalar_lea.smem [#allocation15], 3
    %127 = sst [smem:[%s126]] 64
    %s128 = scalar_lea.smem [#allocation15], 4
    %129 = sst [smem:[%s128]] 128
    %s130 = scalar_lea.smem [#allocation15], 5
    %131 = sst [smem:[%s130]] 2
    %s132 = scalar_lea.smem [#allocation15], 6
    %133 = sst [smem:[%s132]] 256
    %s134 = scalar_lea.smem [#allocation15], 7
    %135 = sst [smem:[%s134]] 64
    %s136 = scalar_lea.smem [#allocation15], 8
    %137 = sst [smem:[%s136]] 4
    %139 = dma.general %s6, 32768, %s118, [#allocation5], [#allocation14], [#allocation15], %s116, 0
    %v140 = vld [vmem:[#allocation7] sm:$0xff]
    %v141 = vld [vmem:[#allocation9] sm:$0xff]
    %v142 = vpack.c.bf16 %v140, %v140
    %v143 = vld [vmem:[#allocation11] sm:$0xf]
    %v144 = vld [vmem:[#allocation11 + $0x4] sm:$0xf]
    %v145 = vld [vmem:[#allocation11 + $0x8] sm:$0xf]
    %v146 = vld [vmem:[#allocation11 + $0xc] sm:$0xf]
    %v147 = vld [vmem:[%s3] sm:$0x1]
    %v149 = vlaneseq
    %v150 = vshrl.u32 %v149, 7
    %v151 = vsub.s32 0, %v150
    %v152 = vrot.slane %v147, %v151
    %v158 = vunpack.c.l.b16 %v143
    %v159 = vunpack.c.l.b16 %v144
    %v160 = vunpack.c.l.b16 %v145
    %v161 = vunpack.c.l.b16 %v146
    %v162 = vpack.c.b16 %v159, %v158
    %v163 = vpack.c.b16 %v161, %v160
    %vm166 = vcmask 261120
    %v168 = vsel %vm166, %v142, 0
    %170 = vmatprep.subr.bf16.mxu0 0
    %171 = vmatpush1.bf16.msra.mxu0 %v162
    %172 = vmatprep.subr.bf16.mxu0 0
    %173 = vmatpush1.bf16.msra.mxu0 %v163
    %174 = vmatprep.subr.bf16.mxu0 0
    %175 = vmatpush1.bf16.msra.mxu0 0
    %176 = vmatprep.subr.bf16.mxu0 0
    %177 = vmatpush1.bf16.msra.mxu0 0
    %178 = vmatprep.subr.bf16.mxu0 0
    %179 = vmatpush1.bf16.msra.mxu0 0
    %180 = vmatprep.subr.bf16.mxu0 0
    %181 = vmatpush1.bf16.msra.mxu0 0
    %182 = vmatprep.subr.bf16.mxu0 0
    %183 = vmatpush1.bf16.msra.mxu0 0
    %184 = vmatprep.subr.bf16.mxu0 0
    %185 = vmatpush1.bf16.msra.mxu0 0
    %186 = vmatprep.subr.bf16.mxu0 0
    %187 = vmatpush1.bf16.msra.mxu0 0
    %188 = vmatprep.subr.bf16.mxu0 0
    %189 = vmatpush1.bf16.msra.mxu0 0
    %190 = vmatprep.subr.bf16.mxu0 0
    %191 = vmatpush1.bf16.msra.mxu0 0
    %192 = vmatprep.subr.bf16.mxu0 0
    %193 = vmatpush1.bf16.msra.mxu0 0
    %194 = vmatprep.subr.bf16.mxu0 0
    %195 = vmatpush1.bf16.msra.mxu0 0
    %196 = vmatprep.subr.bf16.mxu0 0
    %197 = vmatpush1.bf16.msra.mxu0 0
    %198 = vmatprep.subr.bf16.mxu0 0
    %199 = vmatpush1.bf16.msra.mxu0 0
    %200 = vmatprep.subr.bf16.mxu0 0
    %201 = vmatpush1.bf16.msra.mxu0 0
    %202 = vmatprep.mubr.bf16.mxu0 0
    %203 = vmatmul.mubr.bf16.gmra.mrb[0].mxu0 %v168
    %v204 = vpop.f32.mrb[0].mxu0
    %v205 = vadd.f32 %v152, %v204
    %v206 = vpop.f32.mrb[0].mxu0
    %v207 = vpop.f32.mrb[0].mxu0
    %v208 = vpop.f32.mrb[0].mxu0
    %209 = vdwg.mxu0
    %vm210 = vcmask 523264
    %v211 = vsel %vm210, %v205, 0.0
    %212 = vadd.xlane.f32.xlu0 %v211
    %v213 = vpop.xlane.xlu0 %212
    %v214 = vrcp.pop 64.0
    %v215 = vmul.f32 %v213, %v214
    %v216 = vmul.f32 %v205, %v205
    %v217 = vsel %vm210, %v216, 0.0
    %218 = vadd.xlane.f32.xlu0 %v217
    %v219 = vpop.xlane.xlu0 %218
    %v220 = vmul.f32 %v219, %v214
    %v221 = vmul.f32 %v215, %v215
    %v222 = vsub.f32 %v220, %v221
    %v223 = vmax.f32 %v222, 0.0
    %v224 = vsub.f32 %v205, %v215
    %v225 = vadd.f32 %v223, 1e-05
    %v226 = vrsqrt.pop %v225
    %v227 = vmul.f32 %v224, %v226
    %v228 = vsub.f32 %v141, %v227
    %v229 = vand.u32 2147483647, %v228
    %231 = vrot.lane.b32.xlu0 %v227, 64
    %v232 = vpop.permute.xlu0 %231
    %v234 = vsel %vm210, %v141, %v232
    %s235 = smul.u32 4, 24
    %s236 = smul.u32 %s235, 8
    %s237 = sshll.u32 %s236, 4
    %238 = dma.done [#allocation4], %s237
    %v239 = vpack.c.bf16 %v234, %v234
    %v240 = vpack.c.bf16 %v229, %v229
    %v241 = vld [vmem:[#allocation2] sm:$0xff]
    %v242 = vld [vmem:[#allocation2 + $0x8] sm:$0xff]
    %v243 = vld [vmem:[#allocation2 + $0x10] sm:$0xff]
    %v244 = vld [vmem:[#allocation2 + $0x18] sm:$0xff]
    %v245 = vld [vmem:[#allocation2 + $0x20] sm:$0xff]
    %v246 = vld [vmem:[#allocation2 + $0x28] sm:$0xff]
    %v247 = vld [vmem:[#allocation2 + $0x30] sm:$0xff]
    %v248 = vld [vmem:[#allocation2 + $0x38] sm:$0xff]
    %v249 = vld [vmem:[#allocation2 + $0x40] sm:$0xff]
    %v250 = vld [vmem:[#allocation2 + $0x48] sm:$0xff]
    %v251 = vld [vmem:[#allocation2 + $0x50] sm:$0xff]
    %v252 = vld [vmem:[#allocation2 + $0x58] sm:$0xff]
    %v253 = vld [vmem:[#allocation2 + $0x60] sm:$0xff]
    %v254 = vld [vmem:[#allocation2 + $0x68] sm:$0xff]
    %v255 = vld [vmem:[#allocation2 + $0x70] sm:$0xff]
    %v256 = vld [vmem:[#allocation2 + $0x78] sm:$0xff]
    %v257 = vld [vmem:[#allocation2 + $0x80] sm:$0xff]
    %v258 = vld [vmem:[#allocation2 + $0x88] sm:$0xff]
    %v259 = vld [vmem:[#allocation2 + $0x90] sm:$0xff]
    %v260 = vld [vmem:[#allocation2 + $0x98] sm:$0xff]
    %v261 = vld [vmem:[#allocation2 + $0xa0] sm:$0xff]
    %v262 = vld [vmem:[#allocation2 + $0xa8] sm:$0xff]
    %v263 = vld [vmem:[#allocation2 + $0xb0] sm:$0xff]
    %v264 = vld [vmem:[#allocation2 + $0xb8] sm:$0xff]
    %v265 = vld [vmem:[#allocation2 + $0xc0] sm:$0xff]
    %v266 = vld [vmem:[#allocation2 + $0xc8] sm:$0xff]
    %v267 = vld [vmem:[#allocation2 + $0xd0] sm:$0xff]
    %v268 = vld [vmem:[#allocation2 + $0xd8] sm:$0xff]
    %v269 = vld [vmem:[#allocation2 + $0xe0] sm:$0xff]
    %v270 = vld [vmem:[#allocation2 + $0xe8] sm:$0xff]
    %v271 = vld [vmem:[#allocation2 + $0xf0] sm:$0xff]
    %v272 = vld [vmem:[#allocation2 + $0xf8] sm:$0xff]
    %v273 = vld [vmem:[#allocation2 + $0x100] sm:$0xff]
    %v274 = vld [vmem:[#allocation2 + $0x108] sm:$0xff]
    %v275 = vld [vmem:[#allocation2 + $0x110] sm:$0xff]
    %v276 = vld [vmem:[#allocation2 + $0x118] sm:$0xff]
    %v277 = vld [vmem:[#allocation2 + $0x120] sm:$0xff]
    %v278 = vld [vmem:[#allocation2 + $0x128] sm:$0xff]
    %v279 = vld [vmem:[#allocation2 + $0x130] sm:$0xff]
    %v280 = vld [vmem:[#allocation2 + $0x138] sm:$0xff]
    %v281 = vld [vmem:[#allocation2 + $0x140] sm:$0xff]
    %v282 = vld [vmem:[#allocation2 + $0x148] sm:$0xff]
    %v283 = vld [vmem:[#allocation2 + $0x150] sm:$0xff]
    %v284 = vld [vmem:[#allocation2 + $0x158] sm:$0xff]
    %v285 = vld [vmem:[#allocation2 + $0x160] sm:$0xff]
    %v286 = vld [vmem:[#allocation2 + $0x168] sm:$0xff]
    %v287 = vld [vmem:[#allocation2 + $0x170] sm:$0xff]
    %v288 = vld [vmem:[#allocation2 + $0x178] sm:$0xff]
    %v289 = vld [vmem:[#allocation2 + $0x180] sm:$0xff]
    %v290 = vld [vmem:[#allocation2 + $0x188] sm:$0xff]
    %v291 = vld [vmem:[#allocation2 + $0x190] sm:$0xff]
    %v292 = vld [vmem:[#allocation2 + $0x198] sm:$0xff]
    %v293 = vld [vmem:[#allocation2 + $0x1a0] sm:$0xff]
    %v294 = vld [vmem:[#allocation2 + $0x1a8] sm:$0xff]
    %v295 = vld [vmem:[#allocation2 + $0x1b0] sm:$0xff]
    %v296 = vld [vmem:[#allocation2 + $0x1b8] sm:$0xff]
    %v297 = vld [vmem:[#allocation2 + $0x1c0] sm:$0xff]
    %v298 = vld [vmem:[#allocation2 + $0x1c8] sm:$0xff]
    %v299 = vld [vmem:[#allocation2 + $0x1d0] sm:$0xff]
    %v300 = vld [vmem:[#allocation2 + $0x1d8] sm:$0xff]
    %v301 = vld [vmem:[#allocation2 + $0x1e0] sm:$0xff]
    %v302 = vld [vmem:[#allocation2 + $0x1e8] sm:$0xff]
    %v303 = vld [vmem:[#allocation2 + $0x1f0] sm:$0xff]
    %v304 = vld [vmem:[#allocation2 + $0x1f8] sm:$0xff]
    %v305 = vld [vmem:[#allocation2 + $0x200] sm:$0xff]
    %v306 = vld [vmem:[#allocation2 + $0x208] sm:$0xff]
    %v307 = vld [vmem:[#allocation2 + $0x210] sm:$0xff]
    %v308 = vld [vmem:[#allocation2 + $0x218] sm:$0xff]
    %v309 = vld [vmem:[#allocation2 + $0x220] sm:$0xff]
    %v310 = vld [vmem:[#allocation2 + $0x228] sm:$0xff]
    %v311 = vld [vmem:[#allocation2 + $0x230] sm:$0xff]
    %v312 = vld [vmem:[#allocation2 + $0x238] sm:$0xff]
    %v313 = vld [vmem:[#allocation2 + $0x240] sm:$0xff]
    %v314 = vld [vmem:[#allocation2 + $0x248] sm:$0xff]
    %v315 = vld [vmem:[#allocation2 + $0x250] sm:$0xff]
    %v316 = vld [vmem:[#allocation2 + $0x258] sm:$0xff]
    %v317 = vld [vmem:[#allocation2 + $0x260] sm:$0xff]
    %v318 = vld [vmem:[#allocation2 + $0x268] sm:$0xff]
    %v319 = vld [vmem:[#allocation2 + $0x270] sm:$0xff]
    %v320 = vld [vmem:[#allocation2 + $0x278] sm:$0xff]
    %v321 = vld [vmem:[#allocation2 + $0x280] sm:$0xff]
    %v322 = vld [vmem:[#allocation2 + $0x288] sm:$0xff]
    %v323 = vld [vmem:[#allocation2 + $0x290] sm:$0xff]
    %v324 = vld [vmem:[#allocation2 + $0x298] sm:$0xff]
    %v325 = vld [vmem:[#allocation2 + $0x2a0] sm:$0xff]
    %v326 = vld [vmem:[#allocation2 + $0x2a8] sm:$0xff]
    %v327 = vld [vmem:[#allocation2 + $0x2b0] sm:$0xff]
    %v328 = vld [vmem:[#allocation2 + $0x2b8] sm:$0xff]
    %v329 = vld [vmem:[#allocation2 + $0x2c0] sm:$0xff]
    %v330 = vld [vmem:[#allocation2 + $0x2c8] sm:$0xff]
    %v331 = vld [vmem:[#allocation2 + $0x2d0] sm:$0xff]
    %v332 = vld [vmem:[#allocation2 + $0x2d8] sm:$0xff]
    %v333 = vld [vmem:[#allocation2 + $0x2e0] sm:$0xff]
    %v334 = vld [vmem:[#allocation2 + $0x2e8] sm:$0xff]
    %v335 = vld [vmem:[#allocation2 + $0x2f0] sm:$0xff]
    %v336 = vld [vmem:[#allocation2 + $0x2f8] sm:$0xff]
    %v337 = vld [vmem:[%s5] sm:$0xff]
    %v339 = vlaneseq
    %v340 = vshrl.u32 %v339, 7
    %v341 = vsub.s32 0, %v340
    %v342 = vrot.slane %v337, %v341
    %v343 = vlaneseq
    %v344 = vshrl.u32 %v343, 7
    %v345 = vsub.s32 1, %v344
    %v346 = vrot.slane %v337, %v345
    %v347 = vlaneseq
    %v348 = vshrl.u32 %v347, 7
    %v349 = vsub.s32 2, %v348
    %v350 = vrot.slane %v337, %v349
    %v351 = vlaneseq
    %v352 = vshrl.u32 %v351, 7
    %v353 = vsub.s32 3, %v352
    %v354 = vrot.slane %v337, %v353
    %v355 = vlaneseq
    %v356 = vshrl.u32 %v355, 7
    %v357 = vsub.s32 4, %v356
    %v358 = vrot.slane %v337, %v357
    %v359 = vlaneseq
    %v360 = vshrl.u32 %v359, 7
    %v361 = vsub.s32 5, %v360
    %v362 = vrot.slane %v337, %v361
    %v363 = vlaneseq
    %v364 = vshrl.u32 %v363, 7
    %v365 = vsub.s32 6, %v364
    %v366 = vrot.slane %v337, %v365
    %v367 = vlaneseq
    %v368 = vshrl.u32 %v367, 7
    %v369 = vsub.s32 7, %v368
    %v370 = vrot.slane %v337, %v369
    %v380 = vsel %vm210, %v240, 0
    %382 = vmatprep.subr.bf16.mxu0 %v242
    %383 = vmatpush1.bf16.msra.mxu0 %v241
    %384 = vmatprep.subr.bf16.mxu0 %v250
    %385 = vmatpush1.bf16.msra.mxu0 %v249
    %386 = vmatprep.subr.bf16.mxu0 %v258
    %387 = vmatpush1.bf16.msra.mxu0 %v257
    %388 = vmatprep.subr.bf16.mxu0 %v266
    %389 = vmatpush1.bf16.msra.mxu0 %v265
    %390 = vmatprep.subr.bf16.mxu0 %v274
    %391 = vmatpush1.bf16.msra.mxu0 %v273
    %392 = vmatprep.subr.bf16.mxu0 %v282
    %393 = vmatpush1.bf16.msra.mxu0 %v281
    %394 = vmatprep.subr.bf16.mxu0 %v290
    %395 = vmatpush1.bf16.msra.mxu0 %v289
    %396 = vmatprep.subr.bf16.mxu0 %v298
    %397 = vmatpush1.bf16.msra.mxu0 %v297
    %398 = vmatprep.subr.bf16.mxu0 %v306
    %399 = vmatpush1.bf16.msra.mxu0 %v305
    %400 = vmatprep.subr.bf16.mxu0 %v314
    %401 = vmatpush1.bf16.msra.mxu0 %v313
    %402 = vmatprep.subr.bf16.mxu0 %v322
    %403 = vmatpush1.bf16.msra.mxu0 %v321
    %404 = vmatprep.subr.bf16.mxu0 %v330
    %405 = vmatpush1.bf16.msra.mxu0 %v329
    %406 = vmatprep.subr.bf16.mxu0 0
    %407 = vmatpush1.bf16.msra.mxu0 0
    %408 = vmatprep.subr.bf16.mxu0 0
    %409 = vmatpush1.bf16.msra.mxu0 0
    %410 = vmatprep.subr.bf16.mxu0 0
    %411 = vmatpush1.bf16.msra.mxu0 0
    %412 = vmatprep.subr.bf16.mxu0 0
    %413 = vmatpush1.bf16.msra.mxu0 0
    %414 = vmatprep.mubr.bf16.mxu0 %v380
    %415 = vmatmul.mubr.bf16.gmra.mrb[0].mxu0 %v239
    %v416 = vpop.f32.mrb[0].mxu0
    %v417 = vadd.f32 %v342, %v416
    %v418 = vpop.f32.mrb[0].mxu0
    %v419 = vadd.f32 %v346, %v418
    %v420 = vpop.f32.mrb[0].mxu0
    %v421 = vpop.f32.mrb[0].mxu0
    %422 = vdwg.mxu0
    %423 = vmatprep.subr.bf16.mxu0 %v244
    %424 = vmatpush1.bf16.msra.mxu0 %v243
    %425 = vmatprep.subr.bf16.mxu0 %v252
    %426 = vmatpush1.bf16.msra.mxu0 %v251
    %427 = vmatprep.subr.bf16.mxu0 %v260
    %428 = vmatpush1.bf16.msra.mxu0 %v259
    %429 = vmatprep.subr.bf16.mxu0 %v268
    %430 = vmatpush1.bf16.msra.mxu0 %v267
    %431 = vmatprep.subr.bf16.mxu0 %v276
    %432 = vmatpush1.bf16.msra.mxu0 %v275
    %433 = vmatprep.subr.bf16.mxu0 %v284
    %434 = vmatpush1.bf16.msra.mxu0 %v283
    %435 = vmatprep.subr.bf16.mxu0 %v292
    %436 = vmatpush1.bf16.msra.mxu0 %v291
    %437 = vmatprep.subr.bf16.mxu0 %v300
    %438 = vmatpush1.bf16.msra.mxu0 %v299
    %439 = vmatprep.subr.bf16.mxu0 %v308
    %440 = vmatpush1.bf16.msra.mxu0 %v307
    %441 = vmatprep.subr.bf16.mxu0 %v316
    %442 = vmatpush1.bf16.msra.mxu0 %v315
    %443 = vmatprep.subr.bf16.mxu0 %v324
    %444 = vmatpush1.bf16.msra.mxu0 %v323
    %445 = vmatprep.subr.bf16.mxu0 %v332
    %446 = vmatpush1.bf16.msra.mxu0 %v331
    %447 = vmatprep.subr.bf16.mxu0 0
    %448 = vmatpush1.bf16.msra.mxu0 0
    %449 = vmatprep.subr.bf16.mxu0 0
    %450 = vmatpush1.bf16.msra.mxu0 0
    %451 = vmatprep.subr.bf16.mxu0 0
    %452 = vmatpush1.bf16.msra.mxu0 0
    %453 = vmatprep.subr.bf16.mxu0 0
    %454 = vmatpush1.bf16.msra.mxu0 0
    %455 = vmatprep.mubr.bf16.mxu0 %v380
    %456 = vmatmul.mubr.bf16.gmra.mrb[0].mxu0 %v239
    %v457 = vpop.f32.mrb[0].mxu0
    %v458 = vadd.f32 %v350, %v457
    %v459 = vpop.f32.mrb[0].mxu0
    %v460 = vadd.f32 %v354, %v459
    %v461 = vpop.f32.mrb[0].mxu0
    %v462 = vpop.f32.mrb[0].mxu0
    %463 = vdwg.mxu0
    %464 = vmatprep.subr.bf16.mxu0 %v246
    %465 = vmatpush1.bf16.msra.mxu0 %v245
    %466 = vmatprep.subr.bf16.mxu0 %v254
    %467 = vmatpush1.bf16.msra.mxu0 %v253
    %468 = vmatprep.subr.bf16.mxu0 %v262
    %469 = vmatpush1.bf16.msra.mxu0 %v261
    %470 = vmatprep.subr.bf16.mxu0 %v270
    %471 = vmatpush1.bf16.msra.mxu0 %v269
    %472 = vmatprep.subr.bf16.mxu0 %v278
    %473 = vmatpush1.bf16.msra.mxu0 %v277
    %474 = vmatprep.subr.bf16.mxu0 %v286
    %475 = vmatpush1.bf16.msra.mxu0 %v285
    %476 = vmatprep.subr.bf16.mxu0 %v294
    %477 = vmatpush1.bf16.msra.mxu0 %v293
    %478 = vmatprep.subr.bf16.mxu0 %v302
    %479 = vmatpush1.bf16.msra.mxu0 %v301
    %480 = vmatprep.subr.bf16.mxu0 %v310
    %481 = vmatpush1.bf16.msra.mxu0 %v309
    %482 = vmatprep.subr.bf16.mxu0 %v318
    %483 = vmatpush1.bf16.msra.mxu0 %v317
    %484 = vmatprep.subr.bf16.mxu0 %v326
    %485 = vmatpush1.bf16.msra.mxu0 %v325
    %486 = vmatprep.subr.bf16.mxu0 %v334
    %487 = vmatpush1.bf16.msra.mxu0 %v333
    %488 = vmatprep.subr.bf16.mxu0 0
    %489 = vmatpush1.bf16.msra.mxu0 0
    %490 = vmatprep.subr.bf16.mxu0 0
    %491 = vmatpush1.bf16.msra.mxu0 0
    %492 = vmatprep.subr.bf16.mxu0 0
    %493 = vmatpush1.bf16.msra.mxu0 0
    %494 = vmatprep.subr.bf16.mxu0 0
    %495 = vmatpush1.bf16.msra.mxu0 0
    %496 = vmatprep.mubr.bf16.mxu0 %v380
    %497 = vmatmul.mubr.bf16.gmra.mrb[0].mxu0 %v239
    %v498 = vpop.f32.mrb[0].mxu0
    %v499 = vadd.f32 %v358, %v498
    %v500 = vpop.f32.mrb[0].mxu0
    %v501 = vadd.f32 %v362, %v500
    %v502 = vpop.f32.mrb[0].mxu0
    %v503 = vpop.f32.mrb[0].mxu0
    %504 = vdwg.mxu0
    %505 = vmatprep.subr.bf16.mxu0 %v248
    %506 = vmatpush1.bf16.msra.mxu0 %v247
    %507 = vmatprep.subr.bf16.mxu0 %v256
    %508 = vmatpush1.bf16.msra.mxu0 %v255
    %509 = vmatprep.subr.bf16.mxu0 %v264
    %510 = vmatpush1.bf16.msra.mxu0 %v263
    %511 = vmatprep.subr.bf16.mxu0 %v272
    %512 = vmatpush1.bf16.msra.mxu0 %v271
    %513 = vmatprep.subr.bf16.mxu0 %v280
    %514 = vmatpush1.bf16.msra.mxu0 %v279
    %515 = vmatprep.subr.bf16.mxu0 %v288
    %516 = vmatpush1.bf16.msra.mxu0 %v287
    %517 = vmatprep.subr.bf16.mxu0 %v296
    %518 = vmatpush1.bf16.msra.mxu0 %v295
    %519 = vmatprep.subr.bf16.mxu0 %v304
    %520 = vmatpush1.bf16.msra.mxu0 %v303
    %521 = vmatprep.subr.bf16.mxu0 %v312
    %522 = vmatpush1.bf16.msra.mxu0 %v311
    %523 = vmatprep.subr.bf16.mxu0 %v320
    %524 = vmatpush1.bf16.msra.mxu0 %v319
    %525 = vmatprep.subr.bf16.mxu0 %v328
    %526 = vmatpush1.bf16.msra.mxu0 %v327
    %527 = vmatprep.subr.bf16.mxu0 %v336
    %528 = vmatpush1.bf16.msra.mxu0 %v335
    %529 = vmatprep.subr.bf16.mxu0 0
    %530 = vmatpush1.bf16.msra.mxu0 0
    %531 = vmatprep.subr.bf16.mxu0 0
    %532 = vmatpush1.bf16.msra.mxu0 0
    %533 = vmatprep.subr.bf16.mxu0 0
    %534 = vmatpush1.bf16.msra.mxu0 0
    %535 = vmatprep.subr.bf16.mxu0 0
    %536 = vmatpush1.bf16.msra.mxu0 0
    %537 = vmatprep.mubr.bf16.mxu0 %v380
    %538 = vmatmul.mubr.bf16.gmra.mrb[0].mxu0 %v239
    %v539 = vpop.f32.mrb[0].mxu0
    %v540 = vadd.f32 %v366, %v539
    %v541 = vpop.f32.mrb[0].mxu0
    %v542 = vadd.f32 %v370, %v541
    %v543 = vpop.f32.mrb[0].mxu0
    %v544 = vpop.f32.mrb[0].mxu0
    %545 = vdwg.mxu0
    %v546 = vmax.f32 %v417, 0.0
    %v547 = vmax.f32 %v419, 0.0
    %v548 = vmax.f32 %v458, 0.0
    %v549 = vmax.f32 %v460, 0.0
    %v550 = vmax.f32 %v499, 0.0
    %v551 = vmax.f32 %v501, 0.0
    %v552 = vmax.f32 %v540, 0.0
    %v553 = vmax.f32 %v542, 0.0
    %s554 = smul.u32 4, 128
    %s555 = smul.u32 %s554, 4
    %s556 = sshll.u32 %s555, 4
    %557 = dma.done [#allocation5], %s556
    %v558 = vpack.c.bf16 %v546, %v546
    %v559 = vpack.c.bf16 %v547, %v547
    %v560 = vpack.c.bf16 %v548, %v548
    %v561 = vpack.c.bf16 %v549, %v549
    %v562 = vpack.c.bf16 %v550, %v550
    %v563 = vpack.c.bf16 %v551, %v551
    %v564 = vpack.c.bf16 %v552, %v552
    %v565 = vpack.c.bf16 %v553, %v553
    %v566 = vld [vmem:[#allocation3] sm:$0xff]
    %v567 = vld [vmem:[#allocation3 + $0x8] sm:$0xff]
    %v568 = vld [vmem:[#allocation3 + $0x10] sm:$0xff]
    %v569 = vld [vmem:[#allocation3 + $0x18] sm:$0xff]
    %v570 = vld [vmem:[#allocation3 + $0x20] sm:$0xff]
    %v571 = vld [vmem:[#allocation3 + $0x28] sm:$0xff]
    %v572 = vld [vmem:[#allocation3 + $0x30] sm:$0xff]
    %v573 = vld [vmem:[#allocation3 + $0x38] sm:$0xff]
    %v574 = vld [vmem:[#allocation3 + $0x40] sm:$0xff]
    %v575 = vld [vmem:[#allocation3 + $0x48] sm:$0xff]
    %v576 = vld [vmem:[#allocation3 + $0x50] sm:$0xff]
    %v577 = vld [vmem:[#allocation3 + $0x58] sm:$0xff]
    %v578 = vld [vmem:[#allocation3 + $0x60] sm:$0xff]
    %v579 = vld [vmem:[#allocation3 + $0x68] sm:$0xff]
    %v580 = vld [vmem:[#allocation3 + $0x70] sm:$0xff]
    %v581 = vld [vmem:[#allocation3 + $0x78] sm:$0xff]
    %v582 = vld [vmem:[#allocation3 + $0x80] sm:$0xff]
    %v583 = vld [vmem:[#allocation3 + $0x88] sm:$0xff]
    %v584 = vld [vmem:[#allocation3 + $0x90] sm:$0xff]
    %v585 = vld [vmem:[#allocation3 + $0x98] sm:$0xff]
    %v586 = vld [vmem:[#allocation3 + $0xa0] sm:$0xff]
    %v587 = vld [vmem:[#allocation3 + $0xa8] sm:$0xff]
    %v588 = vld [vmem:[#allocation3 + $0xb0] sm:$0xff]
    %v589 = vld [vmem:[#allocation3 + $0xb8] sm:$0xff]
    %v590 = vld [vmem:[#allocation3 + $0xc0] sm:$0xff]
    %v591 = vld [vmem:[#allocation3 + $0xc8] sm:$0xff]
    %v592 = vld [vmem:[#allocation3 + $0xd0] sm:$0xff]
    %v593 = vld [vmem:[#allocation3 + $0xd8] sm:$0xff]
    %v594 = vld [vmem:[#allocation3 + $0xe0] sm:$0xff]
    %v595 = vld [vmem:[#allocation3 + $0xe8] sm:$0xff]
    %v596 = vld [vmem:[#allocation3 + $0xf0] sm:$0xff]
    %v597 = vld [vmem:[#allocation3 + $0xf8] sm:$0xff]
    %v598 = vld [vmem:[#allocation3 + $0x100] sm:$0xff]
    %v599 = vld [vmem:[#allocation3 + $0x108] sm:$0xff]
    %v600 = vld [vmem:[#allocation3 + $0x110] sm:$0xff]
    %v601 = vld [vmem:[#allocation3 + $0x118] sm:$0xff]
    %v602 = vld [vmem:[#allocation3 + $0x120] sm:$0xff]
    %v603 = vld [vmem:[#allocation3 + $0x128] sm:$0xff]
    %v604 = vld [vmem:[#allocation3 + $0x130] sm:$0xff]
    %v605 = vld [vmem:[#allocation3 + $0x138] sm:$0xff]
    %v606 = vld [vmem:[#allocation3 + $0x140] sm:$0xff]
    %v607 = vld [vmem:[#allocation3 + $0x148] sm:$0xff]
    %v608 = vld [vmem:[#allocation3 + $0x150] sm:$0xff]
    %v609 = vld [vmem:[#allocation3 + $0x158] sm:$0xff]
    %v610 = vld [vmem:[#allocation3 + $0x160] sm:$0xff]
    %v611 = vld [vmem:[#allocation3 + $0x168] sm:$0xff]
    %v612 = vld [vmem:[#allocation3 + $0x170] sm:$0xff]
    %v613 = vld [vmem:[#allocation3 + $0x178] sm:$0xff]
    %v614 = vld [vmem:[#allocation3 + $0x180] sm:$0xff]
    %v615 = vld [vmem:[#allocation3 + $0x188] sm:$0xff]
    %v616 = vld [vmem:[#allocation3 + $0x190] sm:$0xff]
    %v617 = vld [vmem:[#allocation3 + $0x198] sm:$0xff]
    %v618 = vld [vmem:[#allocation3 + $0x1a0] sm:$0xff]
    %v619 = vld [vmem:[#allocation3 + $0x1a8] sm:$0xff]
    %v620 = vld [vmem:[#allocation3 + $0x1b0] sm:$0xff]
    %v621 = vld [vmem:[#allocation3 + $0x1b8] sm:$0xff]
    %v622 = vld [vmem:[#allocation3 + $0x1c0] sm:$0xff]
    %v623 = vld [vmem:[#allocation3 + $0x1c8] sm:$0xff]
    %v624 = vld [vmem:[#allocation3 + $0x1d0] sm:$0xff]
    %v625 = vld [vmem:[#allocation3 + $0x1d8] sm:$0xff]
    %v626 = vld [vmem:[#allocation3 + $0x1e0] sm:$0xff]
    %v627 = vld [vmem:[#allocation3 + $0x1e8] sm:$0xff]
    %v628 = vld [vmem:[#allocation3 + $0x1f0] sm:$0xff]
    %v629 = vld [vmem:[#allocation3 + $0x1f8] sm:$0xff]
    %v630 = vld [vmem:[#allocation3 + $0x200] sm:$0xff]
    %v631 = vld [vmem:[#allocation3 + $0x208] sm:$0xff]
    %v632 = vld [vmem:[#allocation3 + $0x210] sm:$0xff]
    %v633 = vld [vmem:[#allocation3 + $0x218] sm:$0xff]
    %v634 = vld [vmem:[#allocation3 + $0x220] sm:$0xff]
    %v635 = vld [vmem:[#allocation3 + $0x228] sm:$0xff]
    %v636 = vld [vmem:[#allocation3 + $0x230] sm:$0xff]
    %v637 = vld [vmem:[#allocation3 + $0x238] sm:$0xff]
    %v638 = vld [vmem:[#allocation3 + $0x240] sm:$0xff]
    %v639 = vld [vmem:[#allocation3 + $0x248] sm:$0xff]
    %v640 = vld [vmem:[#allocation3 + $0x250] sm:$0xff]
    %v641 = vld [vmem:[#allocation3 + $0x258] sm:$0xff]
    %v642 = vld [vmem:[#allocation3 + $0x260] sm:$0xff]
    %v643 = vld [vmem:[#allocation3 + $0x268] sm:$0xff]
    %v644 = vld [vmem:[#allocation3 + $0x270] sm:$0xff]
    %v645 = vld [vmem:[#allocation3 + $0x278] sm:$0xff]
    %v646 = vld [vmem:[#allocation3 + $0x280] sm:$0xff]
    %v647 = vld [vmem:[#allocation3 + $0x288] sm:$0xff]
    %v648 = vld [vmem:[#allocation3 + $0x290] sm:$0xff]
    %v649 = vld [vmem:[#allocation3 + $0x298] sm:$0xff]
    %v650 = vld [vmem:[#allocation3 + $0x2a0] sm:$0xff]
    %v651 = vld [vmem:[#allocation3 + $0x2a8] sm:$0xff]
    %v652 = vld [vmem:[#allocation3 + $0x2b0] sm:$0xff]
    %v653 = vld [vmem:[#allocation3 + $0x2b8] sm:$0xff]
    %v654 = vld [vmem:[#allocation3 + $0x2c0] sm:$0xff]
    %v655 = vld [vmem:[#allocation3 + $0x2c8] sm:$0xff]
    %v656 = vld [vmem:[#allocation3 + $0x2d0] sm:$0xff]
    %v657 = vld [vmem:[#allocation3 + $0x2d8] sm:$0xff]
    %v658 = vld [vmem:[#allocation3 + $0x2e0] sm:$0xff]
    %v659 = vld [vmem:[#allocation3 + $0x2e8] sm:$0xff]
    %v660 = vld [vmem:[#allocation3 + $0x2f0] sm:$0xff]
    %v661 = vld [vmem:[#allocation3 + $0x2f8] sm:$0xff]
    %v662 = vld [vmem:[#allocation3 + $0x300] sm:$0xff]
    %v663 = vld [vmem:[#allocation3 + $0x308] sm:$0xff]
    %v664 = vld [vmem:[#allocation3 + $0x310] sm:$0xff]
    %v665 = vld [vmem:[#allocation3 + $0x318] sm:$0xff]
    %v666 = vld [vmem:[#allocation3 + $0x320] sm:$0xff]
    %v667 = vld [vmem:[#allocation3 + $0x328] sm:$0xff]
    %v668 = vld [vmem:[#allocation3 + $0x330] sm:$0xff]
    %v669 = vld [vmem:[#allocation3 + $0x338] sm:$0xff]
    %v670 = vld [vmem:[#allocation3 + $0x340] sm:$0xff]
    %v671 = vld [vmem:[#allocation3 + $0x348] sm:$0xff]
    %v672 = vld [vmem:[#allocation3 + $0x350] sm:$0xff]
    %v673 = vld [vmem:[#allocation3 + $0x358] sm:$0xff]
    %v674 = vld [vmem:[#allocation3 + $0x360] sm:$0xff]
    %v675 = vld [vmem:[#allocation3 + $0x368] sm:$0xff]
    %v676 = vld [vmem:[#allocation3 + $0x370] sm:$0xff]
    %v677 = vld [vmem:[#allocation3 + $0x378] sm:$0xff]
    %v678 = vld [vmem:[#allocation3 + $0x380] sm:$0xff]
    %v679 = vld [vmem:[#allocation3 + $0x388] sm:$0xff]
    %v680 = vld [vmem:[#allocation3 + $0x390] sm:$0xff]
    %v681 = vld [vmem:[#allocation3 + $0x398] sm:$0xff]
    %v682 = vld [vmem:[#allocation3 + $0x3a0] sm:$0xff]
    %v683 = vld [vmem:[#allocation3 + $0x3a8] sm:$0xff]
    %v684 = vld [vmem:[#allocation3 + $0x3b0] sm:$0xff]
    %v685 = vld [vmem:[#allocation3 + $0x3b8] sm:$0xff]
    %v686 = vld [vmem:[#allocation3 + $0x3c0] sm:$0xff]
    %v687 = vld [vmem:[#allocation3 + $0x3c8] sm:$0xff]
    %v688 = vld [vmem:[#allocation3 + $0x3d0] sm:$0xff]
    %v689 = vld [vmem:[#allocation3 + $0x3d8] sm:$0xff]
    %v690 = vld [vmem:[#allocation3 + $0x3e0] sm:$0xff]
    %v691 = vld [vmem:[#allocation3 + $0x3e8] sm:$0xff]
    %v692 = vld [vmem:[#allocation3 + $0x3f0] sm:$0xff]
    %v693 = vld [vmem:[#allocation3 + $0x3f8] sm:$0xff]
    %v694 = vld [vmem:[#allocation3 + $0x400] sm:$0xff]
    %v695 = vld [vmem:[#allocation3 + $0x408] sm:$0xff]
    %v696 = vld [vmem:[#allocation3 + $0x410] sm:$0xff]
    %v697 = vld [vmem:[#allocation3 + $0x418] sm:$0xff]
    %v698 = vld [vmem:[#allocation3 + $0x420] sm:$0xff]
    %v699 = vld [vmem:[#allocation3 + $0x428] sm:$0xff]
    %v700 = vld [vmem:[#allocation3 + $0x430] sm:$0xff]
    %v701 = vld [vmem:[#allocation3 + $0x438] sm:$0xff]
    %v702 = vld [vmem:[#allocation3 + $0x440] sm:$0xff]
    %v703 = vld [vmem:[#allocation3 + $0x448] sm:$0xff]
    %v704 = vld [vmem:[#allocation3 + $0x450] sm:$0xff]
    %v705 = vld [vmem:[#allocation3 + $0x458] sm:$0xff]
    %v706 = vld [vmem:[#allocation3 + $0x460] sm:$0xff]
    %v707 = vld [vmem:[#allocation3 + $0x468] sm:$0xff]
    %v708 = vld [vmem:[#allocation3 + $0x470] sm:$0xff]
    %v709 = vld [vmem:[#allocation3 + $0x478] sm:$0xff]
    %v710 = vld [vmem:[#allocation3 + $0x480] sm:$0xff]
    %v711 = vld [vmem:[#allocation3 + $0x488] sm:$0xff]
    %v712 = vld [vmem:[#allocation3 + $0x490] sm:$0xff]
    %v713 = vld [vmem:[#allocation3 + $0x498] sm:$0xff]
    %v714 = vld [vmem:[#allocation3 + $0x4a0] sm:$0xff]
    %v715 = vld [vmem:[#allocation3 + $0x4a8] sm:$0xff]
    %v716 = vld [vmem:[#allocation3 + $0x4b0] sm:$0xff]
    %v717 = vld [vmem:[#allocation3 + $0x4b8] sm:$0xff]
    %v718 = vld [vmem:[#allocation3 + $0x4c0] sm:$0xff]
    %v719 = vld [vmem:[#allocation3 + $0x4c8] sm:$0xff]
    %v720 = vld [vmem:[#allocation3 + $0x4d0] sm:$0xff]
    %v721 = vld [vmem:[#allocation3 + $0x4d8] sm:$0xff]
    %v722 = vld [vmem:[#allocation3 + $0x4e0] sm:$0xff]
    %v723 = vld [vmem:[#allocation3 + $0x4e8] sm:$0xff]
    %v724 = vld [vmem:[#allocation3 + $0x4f0] sm:$0xff]
    %v725 = vld [vmem:[#allocation3 + $0x4f8] sm:$0xff]
    %v726 = vld [vmem:[#allocation3 + $0x500] sm:$0xff]
    %v727 = vld [vmem:[#allocation3 + $0x508] sm:$0xff]
    %v728 = vld [vmem:[#allocation3 + $0x510] sm:$0xff]
    %v729 = vld [vmem:[#allocation3 + $0x518] sm:$0xff]
    %v730 = vld [vmem:[#allocation3 + $0x520] sm:$0xff]
    %v731 = vld [vmem:[#allocation3 + $0x528] sm:$0xff]
    %v732 = vld [vmem:[#allocation3 + $0x530] sm:$0xff]
    %v733 = vld [vmem:[#allocation3 + $0x538] sm:$0xff]
    %v734 = vld [vmem:[#allocation3 + $0x540] sm:$0xff]
    %v735 = vld [vmem:[#allocation3 + $0x548] sm:$0xff]
    %v736 = vld [vmem:[#allocation3 + $0x550] sm:$0xff]
    %v737 = vld [vmem:[#allocation3 + $0x558] sm:$0xff]
    %v738 = vld [vmem:[#allocation3 + $0x560] sm:$0xff]
    %v739 = vld [vmem:[#allocation3 + $0x568] sm:$0xff]
    %v740 = vld [vmem:[#allocation3 + $0x570] sm:$0xff]
    %v741 = vld [vmem:[#allocation3 + $0x578] sm:$0xff]
    %v742 = vld [vmem:[#allocation3 + $0x580] sm:$0xff]
    %v743 = vld [vmem:[#allocation3 + $0x588] sm:$0xff]
    %v744 = vld [vmem:[#allocation3 + $0x590] sm:$0xff]
    %v745 = vld [vmem:[#allocation3 + $0x598] sm:$0xff]
    %v746 = vld [vmem:[#allocation3 + $0x5a0] sm:$0xff]
    %v747 = vld [vmem:[#allocation3 + $0x5a8] sm:$0xff]
    %v748 = vld [vmem:[#allocation3 + $0x5b0] sm:$0xff]
    %v749 = vld [vmem:[#allocation3 + $0x5b8] sm:$0xff]
    %v750 = vld [vmem:[#allocation3 + $0x5c0] sm:$0xff]
    %v751 = vld [vmem:[#allocation3 + $0x5c8] sm:$0xff]
    %v752 = vld [vmem:[#allocation3 + $0x5d0] sm:$0xff]
    %v753 = vld [vmem:[#allocation3 + $0x5d8] sm:$0xff]
    %v754 = vld [vmem:[#allocation3 + $0x5e0] sm:$0xff]
    %v755 = vld [vmem:[#allocation3 + $0x5e8] sm:$0xff]
    %v756 = vld [vmem:[#allocation3 + $0x5f0] sm:$0xff]
    %v757 = vld [vmem:[#allocation3 + $0x5f8] sm:$0xff]
    %v758 = vld [vmem:[#allocation3 + $0x600] sm:$0xff]
    %v759 = vld [vmem:[#allocation3 + $0x608] sm:$0xff]
    %v760 = vld [vmem:[#allocation3 + $0x610] sm:$0xff]
    %v761 = vld [vmem:[#allocation3 + $0x618] sm:$0xff]
    %v762 = vld [vmem:[#allocation3 + $0x620] sm:$0xff]
    %v763 = vld [vmem:[#allocation3 + $0x628] sm:$0xff]
    %v764 = vld [vmem:[#allocation3 + $0x630] sm:$0xff]
    %v765 = vld [vmem:[#allocation3 + $0x638] sm:$0xff]
    %v766 = vld [vmem:[#allocation3 + $0x640] sm:$0xff]
    %v767 = vld [vmem:[#allocation3 + $0x648] sm:$0xff]
    %v768 = vld [vmem:[#allocation3 + $0x650] sm:$0xff]
    %v769 = vld [vmem:[#allocation3 + $0x658] sm:$0xff]
    %v770 = vld [vmem:[#allocation3 + $0x660] sm:$0xff]
    %v771 = vld [vmem:[#allocation3 + $0x668] sm:$0xff]
    %v772 = vld [vmem:[#allocation3 + $0x670] sm:$0xff]
    %v773 = vld [vmem:[#allocation3 + $0x678] sm:$0xff]
    %v774 = vld [vmem:[#allocation3 + $0x680] sm:$0xff]
    %v775 = vld [vmem:[#allocation3 + $0x688] sm:$0xff]
    %v776 = vld [vmem:[#allocation3 + $0x690] sm:$0xff]
    %v777 = vld [vmem:[#allocation3 + $0x698] sm:$0xff]
    %v778 = vld [vmem:[#allocation3 + $0x6a0] sm:$0xff]
    %v779 = vld [vmem:[#allocation3 + $0x6a8] sm:$0xff]
    %v780 = vld [vmem:[#allocation3 + $0x6b0] sm:$0xff]
    %v781 = vld [vmem:[#allocation3 + $0x6b8] sm:$0xff]
    %v782 = vld [vmem:[#allocation3 + $0x6c0] sm:$0xff]
    %v783 = vld [vmem:[#allocation3 + $0x6c8] sm:$0xff]
    %v784 = vld [vmem:[#allocation3 + $0x6d0] sm:$0xff]
    %v785 = vld [vmem:[#allocation3 + $0x6d8] sm:$0xff]
    %v786 = vld [vmem:[#allocation3 + $0x6e0] sm:$0xff]
    %v787 = vld [vmem:[#allocation3 + $0x6e8] sm:$0xff]
    %v788 = vld [vmem:[#allocation3 + $0x6f0] sm:$0xff]
    %v789 = vld [vmem:[#allocation3 + $0x6f8] sm:$0xff]
    %v790 = vld [vmem:[#allocation3 + $0x700] sm:$0xff]
    %v791 = vld [vmem:[#allocation3 + $0x708] sm:$0xff]
    %v792 = vld [vmem:[#allocation3 + $0x710] sm:$0xff]
    %v793 = vld [vmem:[#allocation3 + $0x718] sm:$0xff]
    %v794 = vld [vmem:[#allocation3 + $0x720] sm:$0xff]
    %v795 = vld [vmem:[#allocation3 + $0x728] sm:$0xff]
    %v796 = vld [vmem:[#allocation3 + $0x730] sm:$0xff]
    %v797 = vld [vmem:[#allocation3 + $0x738] sm:$0xff]
    %v798 = vld [vmem:[#allocation3 + $0x740] sm:$0xff]
    %v799 = vld [vmem:[#allocation3 + $0x748] sm:$0xff]
    %v800 = vld [vmem:[#allocation3 + $0x750] sm:$0xff]
    %v801 = vld [vmem:[#allocation3 + $0x758] sm:$0xff]
    %v802 = vld [vmem:[#allocation3 + $0x760] sm:$0xff]
    %v803 = vld [vmem:[#allocation3 + $0x768] sm:$0xff]
    %v804 = vld [vmem:[#allocation3 + $0x770] sm:$0xff]
    %v805 = vld [vmem:[#allocation3 + $0x778] sm:$0xff]
    %v806 = vld [vmem:[#allocation3 + $0x780] sm:$0xff]
    %v807 = vld [vmem:[#allocation3 + $0x788] sm:$0xff]
    %v808 = vld [vmem:[#allocation3 + $0x790] sm:$0xff]
    %v809 = vld [vmem:[#allocation3 + $0x798] sm:$0xff]
    %v810 = vld [vmem:[#allocation3 + $0x7a0] sm:$0xff]
    %v811 = vld [vmem:[#allocation3 + $0x7a8] sm:$0xff]
    %v812 = vld [vmem:[#allocation3 + $0x7b0] sm:$0xff]
    %v813 = vld [vmem:[#allocation3 + $0x7b8] sm:$0xff]
    %v814 = vld [vmem:[#allocation3 + $0x7c0] sm:$0xff]
    %v815 = vld [vmem:[#allocation3 + $0x7c8] sm:$0xff]
    %v816 = vld [vmem:[#allocation3 + $0x7d0] sm:$0xff]
    %v817 = vld [vmem:[#allocation3 + $0x7d8] sm:$0xff]
    %v818 = vld [vmem:[#allocation3 + $0x7e0] sm:$0xff]
    %v819 = vld [vmem:[#allocation3 + $0x7e8] sm:$0xff]
    %v820 = vld [vmem:[#allocation3 + $0x7f0] sm:$0xff]
    %v821 = vld [vmem:[#allocation3 + $0x7f8] sm:$0xff]
    %v822 = vld [vmem:[%s7] sm:$0xf]
    %v824 = vlaneseq
    %v825 = vshrl.u32 %v824, 7
    %v826 = vsub.s32 0, %v825
    %v827 = vrot.slane %v822, %v826
    %v828 = vlaneseq
    %v829 = vshrl.u32 %v828, 7
    %v830 = vsub.s32 1, %v829
    %v831 = vrot.slane %v822, %v830
    %v832 = vlaneseq
    %v833 = vshrl.u32 %v832, 7
    %v834 = vsub.s32 2, %v833
    %v835 = vrot.slane %v822, %v834
    %v836 = vlaneseq
    %v837 = vshrl.u32 %v836, 7
    %v838 = vsub.s32 3, %v837
    %v839 = vrot.slane %v822, %v838
    %844 = vmatprep.subr.bf16.mxu0 %v567
    %845 = vmatpush1.bf16.msra.mxu0 %v566
    %846 = vmatprep.subr.bf16.mxu0 %v571
    %847 = vmatpush1.bf16.msra.mxu0 %v570
    %848 = vmatprep.subr.bf16.mxu0 %v575
    %849 = vmatpush1.bf16.msra.mxu0 %v574
    %850 = vmatprep.subr.bf16.mxu0 %v579
    %851 = vmatpush1.bf16.msra.mxu0 %v578
    %852 = vmatprep.subr.bf16.mxu0 %v583
    %853 = vmatpush1.bf16.msra.mxu0 %v582
    %854 = vmatprep.subr.bf16.mxu0 %v587
    %855 = vmatpush1.bf16.msra.mxu0 %v586
    %856 = vmatprep.subr.bf16.mxu0 %v591
    %857 = vmatpush1.bf16.msra.mxu0 %v590
    %858 = vmatprep.subr.bf16.mxu0 %v595
    %859 = vmatpush1.bf16.msra.mxu0 %v594
    %860 = vmatprep.subr.bf16.mxu0 %v599
    %861 = vmatpush1.bf16.msra.mxu0 %v598
    %862 = vmatprep.subr.bf16.mxu0 %v603
    %863 = vmatpush1.bf16.msra.mxu0 %v602
    %864 = vmatprep.subr.bf16.mxu0 %v607
    %865 = vmatpush1.bf16.msra.mxu0 %v606
    %866 = vmatprep.subr.bf16.mxu0 %v611
    %867 = vmatpush1.bf16.msra.mxu0 %v610
    %868 = vmatprep.subr.bf16.mxu0 %v615
    %869 = vmatpush1.bf16.msra.mxu0 %v614
    %870 = vmatprep.subr.bf16.mxu0 %v619
    %871 = vmatpush1.bf16.msra.mxu0 %v618
    %872 = vmatprep.subr.bf16.mxu0 %v623
    %873 = vmatpush1.bf16.msra.mxu0 %v622
    %874 = vmatprep.subr.bf16.mxu0 %v627
    %875 = vmatpush1.bf16.msra.mxu0 %v626
    %876 = vmatprep.mubr.bf16.mxu0 %v559
    %877 = vmatmul.mubr.bf16.gmra.mrb[0].mxu0 %v558
    %v878 = vpop.f32.mrb[0].mxu0
    %v879 = vadd.f32 %v827, %v878
    %v880 = vpop.f32.mrb[0].mxu0
    %v881 = vadd.f32 %v831, %v880
    %v882 = vpop.f32.mrb[0].mxu0
    %v883 = vpop.f32.mrb[0].mxu0
    %884 = vdwg.mxu0
    %885 = vmatprep.subr.bf16.mxu0 %v631
    %886 = vmatpush1.bf16.msra.mxu0 %v630
    %887 = vmatprep.subr.bf16.mxu0 %v635
    %888 = vmatpush1.bf16.msra.mxu0 %v634
    %889 = vmatprep.subr.bf16.mxu0 %v639
    %890 = vmatpush1.bf16.msra.mxu0 %v638
    %891 = vmatprep.subr.bf16.mxu0 %v643
    %892 = vmatpush1.bf16.msra.mxu0 %v642
    %893 = vmatprep.subr.bf16.mxu0 %v647
    %894 = vmatpush1.bf16.msra.mxu0 %v646
    %895 = vmatprep.subr.bf16.mxu0 %v651
    %896 = vmatpush1.bf16.msra.mxu0 %v650
    %897 = vmatprep.subr.bf16.mxu0 %v655
    %898 = vmatpush1.bf16.msra.mxu0 %v654
    %899 = vmatprep.subr.bf16.mxu0 %v659
    %900 = vmatpush1.bf16.msra.mxu0 %v658
    %901 = vmatprep.subr.bf16.mxu0 %v663
    %902 = vmatpush1.bf16.msra.mxu0 %v662
    %903 = vmatprep.subr.bf16.mxu0 %v667
    %904 = vmatpush1.bf16.msra.mxu0 %v666
    %905 = vmatprep.subr.bf16.mxu0 %v671
    %906 = vmatpush1.bf16.msra.mxu0 %v670
    %907 = vmatprep.subr.bf16.mxu0 %v675
    %908 = vmatpush1.bf16.msra.mxu0 %v674
    %909 = vmatprep.subr.bf16.mxu0 %v679
    %910 = vmatpush1.bf16.msra.mxu0 %v678
    %911 = vmatprep.subr.bf16.mxu0 %v683
    %912 = vmatpush1.bf16.msra.mxu0 %v682
    %913 = vmatprep.subr.bf16.mxu0 %v687
    %914 = vmatpush1.bf16.msra.mxu0 %v686
    %915 = vmatprep.subr.bf16.mxu0 %v691
    %916 = vmatpush1.bf16.msra.mxu0 %v690
    %917 = vmatprep.mubr.bf16.mxu0 %v561
    %918 = vmatmul.mubr.bf16.gmra.mrb[0].mxu0 %v560
    %v919 = vpop.f32.mrb[0].mxu0
    %v920 = vadd.f32 %v879, %v919
    %v921 = vpop.f32.mrb[0].mxu0
    %v922 = vadd.f32 %v881, %v921
    %v923 = vpop.f32.mrb[0].mxu0
    %v924 = vpop.f32.mrb[0].mxu0
    %925 = vdwg.mxu0
    %926 = vmatprep.subr.bf16.mxu0 %v695
    %927 = vmatpush1.bf16.msra.mxu0 %v694
    %928 = vmatprep.subr.bf16.mxu0 %v699
    %929 = vmatpush1.bf16.msra.mxu0 %v698
    %930 = vmatprep.subr.bf16.mxu0 %v703
    %931 = vmatpush1.bf16.msra.mxu0 %v702
    %932 = vmatprep.subr.bf16.mxu0 %v707
    %933 = vmatpush1.bf16.msra.mxu0 %v706
    %934 = vmatprep.subr.bf16.mxu0 %v711
    %935 = vmatpush1.bf16.msra.mxu0 %v710
    %936 = vmatprep.subr.bf16.mxu0 %v715
    %937 = vmatpush1.bf16.msra.mxu0 %v714
    %938 = vmatprep.subr.bf16.mxu0 %v719
    %939 = vmatpush1.bf16.msra.mxu0 %v718
    %940 = vmatprep.subr.bf16.mxu0 %v723
    %941 = vmatpush1.bf16.msra.mxu0 %v722
    %942 = vmatprep.subr.bf16.mxu0 %v727
    %943 = vmatpush1.bf16.msra.mxu0 %v726
    %944 = vmatprep.subr.bf16.mxu0 %v731
    %945 = vmatpush1.bf16.msra.mxu0 %v730
    %946 = vmatprep.subr.bf16.mxu0 %v735
    %947 = vmatpush1.bf16.msra.mxu0 %v734
    %948 = vmatprep.subr.bf16.mxu0 %v739
    %949 = vmatpush1.bf16.msra.mxu0 %v738
    %950 = vmatprep.subr.bf16.mxu0 %v743
    %951 = vmatpush1.bf16.msra.mxu0 %v742
    %952 = vmatprep.subr.bf16.mxu0 %v747
    %953 = vmatpush1.bf16.msra.mxu0 %v746
    %954 = vmatprep.subr.bf16.mxu0 %v751
    %955 = vmatpush1.bf16.msra.mxu0 %v750
    %956 = vmatprep.subr.bf16.mxu0 %v755
    %957 = vmatpush1.bf16.msra.mxu0 %v754
    %958 = vmatprep.mubr.bf16.mxu0 %v563
    %959 = vmatmul.mubr.bf16.gmra.mrb[0].mxu0 %v562
    %v960 = vpop.f32.mrb[0].mxu0
    %v961 = vadd.f32 %v920, %v960
    %v962 = vpop.f32.mrb[0].mxu0
    %v963 = vadd.f32 %v922, %v962
    %v964 = vpop.f32.mrb[0].mxu0
    %v965 = vpop.f32.mrb[0].mxu0
    %966 = vdwg.mxu0
    %967 = vmatprep.subr.bf16.mxu0 %v759
    %968 = vmatpush1.bf16.msra.mxu0 %v758
    %969 = vmatprep.subr.bf16.mxu0 %v763
    %970 = vmatpush1.bf16.msra.mxu0 %v762
    %971 = vmatprep.subr.bf16.mxu0 %v767
    %972 = vmatpush1.bf16.msra.mxu0 %v766
    %973 = vmatprep.subr.bf16.mxu0 %v771
    %974 = vmatpush1.bf16.msra.mxu0 %v770
    %975 = vmatprep.subr.bf16.mxu0 %v775
    %976 = vmatpush1.bf16.msra.mxu0 %v774
    %977 = vmatprep.subr.bf16.mxu0 %v779
    %978 = vmatpush1.bf16.msra.mxu0 %v778
    %979 = vmatprep.subr.bf16.mxu0 %v783
    %980 = vmatpush1.bf16.msra.mxu0 %v782
    %981 = vmatprep.subr.bf16.mxu0 %v787
    %982 = vmatpush1.bf16.msra.mxu0 %v786
    %983 = vmatprep.subr.bf16.mxu0 %v791
    %984 = vmatpush1.bf16.msra.mxu0 %v790
    %985 = vmatprep.subr.bf16.mxu0 %v795
    %986 = vmatpush1.bf16.msra.mxu0 %v794
    %987 = vmatprep.subr.bf16.mxu0 %v799
    %988 = vmatpush1.bf16.msra.mxu0 %v798
    %989 = vmatprep.subr.bf16.mxu0 %v803
    %990 = vmatpush1.bf16.msra.mxu0 %v802
    %991 = vmatprep.subr.bf16.mxu0 %v807
    %992 = vmatpush1.bf16.msra.mxu0 %v806
    %993 = vmatprep.subr.bf16.mxu0 %v811
    %994 = vmatpush1.bf16.msra.mxu0 %v810
    %995 = vmatprep.subr.bf16.mxu0 %v815
    %996 = vmatpush1.bf16.msra.mxu0 %v814
    %997 = vmatprep.subr.bf16.mxu0 %v819
    %998 = vmatpush1.bf16.msra.mxu0 %v818
    %999 = vmatprep.mubr.bf16.mxu0 %v565
    %1000 = vmatmul.mubr.bf16.gmra.mrb[0].mxu0 %v564
    %v1001 = vpop.f32.mrb[0].mxu0
    %v1002 = vadd.f32 %v961, %v1001
    %v1003 = vpop.f32.mrb[0].mxu0
    %v1004 = vadd.f32 %v963, %v1003
    %v1005 = vpop.f32.mrb[0].mxu0
    %v1006 = vpop.f32.mrb[0].mxu0
    %1007 = vdwg.mxu0
    %1008 = vmatprep.subr.bf16.mxu0 %v569
    %1009 = vmatpush1.bf16.msra.mxu0 %v568
    %1010 = vmatprep.subr.bf16.mxu0 %v573
    %1011 = vmatpush1.bf16.msra.mxu0 %v572
    %1012 = vmatprep.subr.bf16.mxu0 %v577
    %1013 = vmatpush1.bf16.msra.mxu0 %v576
    %1014 = vmatprep.subr.bf16.mxu0 %v581
    %1015 = vmatpush1.bf16.msra.mxu0 %v580
    %1016 = vmatprep.subr.bf16.mxu0 %v585
    %1017 = vmatpush1.bf16.msra.mxu0 %v584
    %1018 = vmatprep.subr.bf16.mxu0 %v589
    %1019 = vmatpush1.bf16.msra.mxu0 %v588
    %1020 = vmatprep.subr.bf16.mxu0 %v593
    %1021 = vmatpush1.bf16.msra.mxu0 %v592
    %1022 = vmatprep.subr.bf16.mxu0 %v597
    %1023 = vmatpush1.bf16.msra.mxu0 %v596
    %1024 = vmatprep.subr.bf16.mxu0 %v601
    %1025 = vmatpush1.bf16.msra.mxu0 %v600
    %1026 = vmatprep.subr.bf16.mxu0 %v605
    %1027 = vmatpush1.bf16.msra.mxu0 %v604
    %1028 = vmatprep.subr.bf16.mxu0 %v609
    %1029 = vmatpush1.bf16.msra.mxu0 %v608
    %1030 = vmatprep.subr.bf16.mxu0 %v613
    %1031 = vmatpush1.bf16.msra.mxu0 %v612
    %1032 = vmatprep.subr.bf16.mxu0 %v617
    %1033 = vmatpush1.bf16.msra.mxu0 %v616
    %1034 = vmatprep.subr.bf16.mxu0 %v621
    %1035 = vmatpush1.bf16.msra.mxu0 %v620
    %1036 = vmatprep.subr.bf16.mxu0 %v625
    %1037 = vmatpush1.bf16.msra.mxu0 %v624
    %1038 = vmatprep.subr.bf16.mxu0 %v629
    %1039 = vmatpush1.bf16.msra.mxu0 %v628
    %1040 = vmatprep.mubr.bf16.mxu0 %v559
    %1041 = vmatmul.mubr.bf16.gmra.mrb[0].mxu0 %v558
    %v1042 = vpop.f32.mrb[0].mxu0
    %v1043 = vadd.f32 %v835, %v1042
    %v1044 = vpop.f32.mrb[0].mxu0
    %v1045 = vadd.f32 %v839, %v1044
    %v1046 = vpop.f32.mrb[0].mxu0
    %v1047 = vpop.f32.mrb[0].mxu0
    %1048 = vdwg.mxu0
    %1049 = vmatprep.subr.bf16.mxu0 %v633
    %1050 = vmatpush1.bf16.msra.mxu0 %v632
    %1051 = vmatprep.subr.bf16.mxu0 %v637
    %1052 = vmatpush1.bf16.msra.mxu0 %v636
    %1053 = vmatprep.subr.bf16.mxu0 %v641
    %1054 = vmatpush1.bf16.msra.mxu0 %v640
    %1055 = vmatprep.subr.bf16.mxu0 %v645
    %1056 = vmatpush1.bf16.msra.mxu0 %v644
    %1057 = vmatprep.subr.bf16.mxu0 %v649
    %1058 = vmatpush1.bf16.msra.mxu0 %v648
    %1059 = vmatprep.subr.bf16.mxu0 %v653
    %1060 = vmatpush1.bf16.msra.mxu0 %v652
    %1061 = vmatprep.subr.bf16.mxu0 %v657
    %1062 = vmatpush1.bf16.msra.mxu0 %v656
    %1063 = vmatprep.subr.bf16.mxu0 %v661
    %1064 = vmatpush1.bf16.msra.mxu0 %v660
    %1065 = vmatprep.subr.bf16.mxu0 %v665
    %1066 = vmatpush1.bf16.msra.mxu0 %v664
    %1067 = vmatprep.subr.bf16.mxu0 %v669
    %1068 = vmatpush1.bf16.msra.mxu0 %v668
    %1069 = vmatprep.subr.bf16.mxu0 %v673
    %1070 = vmatpush1.bf16.msra.mxu0 %v672
    %1071 = vmatprep.subr.bf16.mxu0 %v677
    %1072 = vmatpush1.bf16.msra.mxu0 %v676
    %1073 = vmatprep.subr.bf16.mxu0 %v681
    %1074 = vmatpush1.bf16.msra.mxu0 %v680
    %1075 = vmatprep.subr.bf16.mxu0 %v685
    %1076 = vmatpush1.bf16.msra.mxu0 %v684
    %1077 = vmatprep.subr.bf16.mxu0 %v689
    %1078 = vmatpush1.bf16.msra.mxu0 %v688
    %1079 = vmatprep.subr.bf16.mxu0 %v693
    %1080 = vmatpush1.bf16.msra.mxu0 %v692
    %1081 = vmatprep.mubr.bf16.mxu0 %v561
    %1082 = vmatmul.mubr.bf16.gmra.mrb[0].mxu0 %v560
    %v1083 = vpop.f32.mrb[0].mxu0
    %v1084 = vadd.f32 %v1043, %v1083
    %v1085 = vpop.f32.mrb[0].mxu0
    %v1086 = vadd.f32 %v1045, %v1085
    %v1087 = vpop.f32.mrb[0].mxu0
    %v1088 = vpop.f32.mrb[0].mxu0
    %1089 = vdwg.mxu0
    %1090 = vmatprep.subr.bf16.mxu0 %v697
    %1091 = vmatpush1.bf16.msra.mxu0 %v696
    %1092 = vmatprep.subr.bf16.mxu0 %v701
    %1093 = vmatpush1.bf16.msra.mxu0 %v700
    %1094 = vmatprep.subr.bf16.mxu0 %v705
    %1095 = vmatpush1.bf16.msra.mxu0 %v704
    %1096 = vmatprep.subr.bf16.mxu0 %v709
    %1097 = vmatpush1.bf16.msra.mxu0 %v708
    %1098 = vmatprep.subr.bf16.mxu0 %v713
    %1099 = vmatpush1.bf16.msra.mxu0 %v712
    %1100 = vmatprep.subr.bf16.mxu0 %v717
    %1101 = vmatpush1.bf16.msra.mxu0 %v716
    %1102 = vmatprep.subr.bf16.mxu0 %v721
    %1103 = vmatpush1.bf16.msra.mxu0 %v720
    %1104 = vmatprep.subr.bf16.mxu0 %v725
    %1105 = vmatpush1.bf16.msra.mxu0 %v724
    %1106 = vmatprep.subr.bf16.mxu0 %v729
    %1107 = vmatpush1.bf16.msra.mxu0 %v728
    %1108 = vmatprep.subr.bf16.mxu0 %v733
    %1109 = vmatpush1.bf16.msra.mxu0 %v732
    %1110 = vmatprep.subr.bf16.mxu0 %v737
    %1111 = vmatpush1.bf16.msra.mxu0 %v736
    %1112 = vmatprep.subr.bf16.mxu0 %v741
    %1113 = vmatpush1.bf16.msra.mxu0 %v740
    %1114 = vmatprep.subr.bf16.mxu0 %v745
    %1115 = vmatpush1.bf16.msra.mxu0 %v744
    %1116 = vmatprep.subr.bf16.mxu0 %v749
    %1117 = vmatpush1.bf16.msra.mxu0 %v748
    %1118 = vmatprep.subr.bf16.mxu0 %v753
    %1119 = vmatpush1.bf16.msra.mxu0 %v752
    %1120 = vmatprep.subr.bf16.mxu0 %v757
    %1121 = vmatpush1.bf16.msra.mxu0 %v756
    %1122 = vmatprep.mubr.bf16.mxu0 %v563
    %1123 = vmatmul.mubr.bf16.gmra.mrb[0].mxu0 %v562
    %v1124 = vpop.f32.mrb[0].mxu0
    %v1125 = vadd.f32 %v1084, %v1124
    %v1126 = vpop.f32.mrb[0].mxu0
    %v1127 = vadd.f32 %v1086, %v1126
    %v1128 = vpop.f32.mrb[0].mxu0
    %v1129 = vpop.f32.mrb[0].mxu0
    %1130 = vdwg.mxu0
    %1131 = vmatprep.subr.bf16.mxu0 %v761
    %1132 = vmatpush1.bf16.msra.mxu0 %v760
    %1133 = vmatprep.subr.bf16.mxu0 %v765
    %1134 = vmatpush1.bf16.msra.mxu0 %v764
    %1135 = vmatprep.subr.bf16.mxu0 %v769
    %1136 = vmatpush1.bf16.msra.mxu0 %v768
    %1137 = vmatprep.subr.bf16.mxu0 %v773
    %1138 = vmatpush1.bf16.msra.mxu0 %v772
    %1139 = vmatprep.subr.bf16.mxu0 %v777
    %1140 = vmatpush1.bf16.msra.mxu0 %v776
    %1141 = vmatprep.subr.bf16.mxu0 %v781
    %1142 = vmatpush1.bf16.msra.mxu0 %v780
    %1143 = vmatprep.subr.bf16.mxu0 %v785
    %1144 = vmatpush1.bf16.msra.mxu0 %v784
    %1145 = vmatprep.subr.bf16.mxu0 %v789
    %1146 = vmatpush1.bf16.msra.mxu0 %v788
    %1147 = vmatprep.subr.bf16.mxu0 %v793
    %1148 = vmatpush1.bf16.msra.mxu0 %v792
    %1149 = vmatprep.subr.bf16.mxu0 %v797
    %1150 = vmatpush1.bf16.msra.mxu0 %v796
    %1151 = vmatprep.subr.bf16.mxu0 %v801
    %1152 = vmatpush1.bf16.msra.mxu0 %v800
    %1153 = vmatprep.subr.bf16.mxu0 %v805
    %1154 = vmatpush1.bf16.msra.mxu0 %v804
    %1155 = vmatprep.subr.bf16.mxu0 %v809
    %1156 = vmatpush1.bf16.msra.mxu0 %v808
    %1157 = vmatprep.subr.bf16.mxu0 %v813
    %1158 = vmatpush1.bf16.msra.mxu0 %v812
    %1159 = vmatprep.subr.bf16.mxu0 %v817
    %1160 = vmatpush1.bf16.msra.mxu0 %v816
    %1161 = vmatprep.subr.bf16.mxu0 %v821
    %1162 = vmatpush1.bf16.msra.mxu0 %v820
    %1163 = vmatprep.mubr.bf16.mxu0 %v565
    %1164 = vmatmul.mubr.bf16.gmra.mrb[0].mxu0 %v564
    %v1165 = vpop.f32.mrb[0].mxu0
    %v1166 = vadd.f32 %v1125, %v1165
    %v1167 = vpop.f32.mrb[0].mxu0
    %v1168 = vadd.f32 %v1127, %v1167
    %v1169 = vpop.f32.mrb[0].mxu0
    %v1170 = vpop.f32.mrb[0].mxu0
    %1171 = vdwg.mxu0
    %v1172 = vmax.f32 %v1002, 0.0
    %v1173 = vmax.f32 %v1004, 0.0
    %v1174 = vmax.f32 %v1166, 0.0
    %v1175 = vmax.f32 %v1168, 0.0
    %v1176 = vld [vmem:[%s8] sm:$0xf]
    %v1178 = vlaneseq
    %v1179 = vshrl.u32 %v1178, 7
    %v1180 = vsub.s32 0, %v1179
    %v1181 = vrot.slane %v1176, %v1180
    %v1182 = vlaneseq
    %v1183 = vshrl.u32 %v1182, 7
    %v1184 = vsub.s32 1, %v1183
    %v1185 = vrot.slane %v1176, %v1184
    %v1186 = vlaneseq
    %v1187 = vshrl.u32 %v1186, 7
    %v1188 = vsub.s32 2, %v1187
    %v1189 = vrot.slane %v1176, %v1188
    %v1190 = vlaneseq
    %v1191 = vshrl.u32 %v1190, 7
    %v1192 = vsub.s32 3, %v1191
    %v1193 = vrot.slane %v1176, %v1192
    %v1198 = vmul.f32 %v1172, %v1181
    %v1199 = vmul.f32 %v1173, %v1185
    %v1200 = vmul.f32 %v1174, %v1189
    %v1201 = vmul.f32 %v1175, %v1193
    %v1202 = vadd.f32 %v1198, %v1199
    %v1203 = vadd.f32 %v1202, %v1200
    %v1204 = vadd.f32 %v1203, %v1201
    %1205 = vadd.xlane.f32.xlu0 %v1204
    %v1206 = vpop.xlane.xlu0 %1205
    %v1207 = vld [vmem:[#allocation6] sm:$0x1]
    %v1209 = vlaneseq
    %v1210 = vshrl.u32 %v1209, 7
    %v1211 = vsub.s32 0, %v1210
    %v1212 = vrot.slane %v1207, %v1211
    %v1214 = vadd.f32 %v1206, %v1212
    %vm1215 = vcmask 7168
    %1216 = vst.msk [vmem:[%s10] sm:$0xff] %vm1215, %v1214
    // Predicated region
    $region46: #{tpu_custom_call.1} parent=1 // pred_check
      _
    $region47: #{tpu_custom_call.1} parent=1 // pred_check_branch
      %1218 = sbr.rel (0) target = $region49
    $region48: #{tpu_custom_call.1} parent=1 // pred_region
      _
    $region49: #{tpu_custom_call.1} parent=1 // pred_fallthru
      _
    // Predicated region
    $region50: #{tpu_custom_call.1} parent=1 // pred_check
      _
    $region51: #{tpu_custom_call.1} parent=1 // pred_check_branch
      %1220 = sbr.rel (0) target = $region53
    $region52: #{tpu_custom_call.1} parent=1 // pred_region
      _
    $region53: #{tpu_custom_call.1} parent=1 // pred_fallthru
      _
    %1221 = vsyncpa [#allocation8], 1
    %1222 = vsyncpa [#allocation10], 1
  %1223 = vsyncmov [#allocation4]
  %s1224 = vpop.sfrf %1223
  %p1225 = scmp.eq.s32.totalorder %s1224, 0
  %p1226 = pneg %p1225
  %1228 = shalt.err (%p1226)
  %1229 = vsyncmov [#allocation5]
  %s1230 = vpop.sfrf %1229
  %p1231 = scmp.eq.s32.totalorder %s1230, 0
  %p1232 = pneg %p1231
  %1234 = shalt.err (%p1232)

</llo_original>
